<compile_context>
chip_gen: v7x
topology: tpu7x:2x2x1
jax: 0.10.0
libtpu: 0.0.40
codegen_flags: <defaults>
</compile_context>

<pallas_src>
import jax
import jax.numpy as jnp
from jax.experimental import pallas as pl
from jax.experimental.pallas import tpu as pltpu

BN_EPS = 1e-5
NUM_CLASSES = 2


def _round_up(n, m):
    return (n + m - 1) // m * m


# ----------------------------------------------------------------------------- kernel
def qcnet_kernel(x_ref, w1, b1, w2, b2, w3, b3, w4, b4, wc, bc, o_ref):
    """One batch tile (batch on lanes): features -> folded classifier -> 2-class log-softmax."""
    x = x_ref[...]                                            # (1, T) f32

    # Layer 1 (in_features == 1): broadcast multiply on the VPU; BN already folded.
    h = jnp.maximum(w1[...] * x + b1[...], 0.0)               # (32, T)

    def lin_relu(h, w_ref, b_ref):
        # Weights-stationary bf16 matmul on the MXU, f32 accumulation; BN folded on host.
        y = jnp.dot(w_ref[...], h.astype(jnp.bfloat16),
                    preferred_element_type=jnp.float32) + b_ref[...]
        return jnp.maximum(y, 0.0)

    h = lin_relu(h, w2, b2)                                   # (64, T)
    h = lin_relu(h, w3, b3)                                   # (128, T)
    h = lin_relu(h, w4, b4)                                   # (256, T)

    # Folded classifier: (2,256)_bf16 @ (256,T)_bf16 -> (2,T) f32, lane-dense.
    logits = jnp.dot(wc[...], h.astype(jnp.bfloat16),
                     preferred_element_type=jnp.float32) + bc[...]      # (2, T)

    # 2-class log-softmax along the tiny sublane axis (no dead lanes).
    m = jnp.max(logits, axis=0, keepdims=True)
    z = logits - m
    lse = jnp.log(jnp.sum(jnp.exp(z), axis=0, keepdims=True))
    o_ref[...] = (z - lse).astype(o_ref.dtype)                # (2, T) bf16 store


# ----------------------------------------------------------------------------- wrapper
def qcnet_forward(x, kernel_params, tile_n=2048):
    """x: (N, 1) float32 -> (N, 2) float32 log-probabilities."""
    n = x.shape[0]
    # Lane tile must be a multiple of 128; cap it at the (padded) batch.
    tile_n = max(128, min(int(tile_n) // 128 * 128, _round_up(n, 128)))
    # Prefer >= 2 grid steps so the "parallel" batch axis splits across v7x's two TCs.
    if _round_up(n, tile_n) // tile_n < 2 and tile_n > 128:
        tile_n = max(128, _round_up((n + 1) // 2, 128))
    n_pad = _round_up(n, tile_n)

    xr = x.astype(jnp.float32).reshape(1, -1)                 # batch onto the lane axis
    if n_pad != n:
        xr = jnp.pad(xr, ((0, 0), (0, n_pad - n)))

    in_specs = [pl.BlockSpec((1, tile_n), lambda i: (0, i))]
    # Weights/biases: full array, constant block index -> stay VMEM-resident across steps.
    in_specs += [pl.BlockSpec(p.shape, lambda i: (0, 0)) for p in kernel_params]

    out = pl.pallas_call(
        qcnet_kernel,
        out_shape=jax.ShapeDtypeStruct((NUM_CLASSES, n_pad), jnp.bfloat16),
        grid=(n_pad // tile_n,),
        in_specs=in_specs,
        out_specs=pl.BlockSpec((NUM_CLASSES, tile_n), lambda i: (0, i)),
        compiler_params=pltpu.CompilerParams(
            dimension_semantics=("parallel",)),       # shard batch grid across TCs (v7x)
    )(xr, *kernel_params)
    # Tiny (2, n_pad) -> (n, 2) unpack; negligible vs. the old 128-lane padded slice.
    return out[:, :n].T.astype(jnp.float32)


# ----------------------------------------------------------------------------- params
def make_raw_params(key):
    """Deterministic synthetic params with the module's original per-layer shapes."""
    dims = [1, 32, 64, 128, 256]
    keys = iter(jax.random.split(key, 40))
    feats = []
    for i in range(4):
        fi, fo = dims[i], dims[i + 1]
        bound = 1.0 / jnp.sqrt(jnp.float32(fi))
        w = jax.random.uniform(next(keys), (fi, fo), jnp.float32, -bound, bound)
        b = jax.random.uniform(next(keys), (fo,), jnp.float32, -bound, bound)
        gamma = 1.0 + 0.1 * jax.random.normal(next(keys), (fo,), jnp.float32)
        beta = 0.1 * jax.random.normal(next(keys), (fo,), jnp.float32)
        rmean = 0.1 * jax.random.normal(next(keys), (fo,), jnp.float32)
        rvar = 1.0 + 0.1 * jax.random.uniform(next(keys), (fo,), jnp.float32)
        feats.append((w, b, gamma, beta, rmean, rvar))
    cls = []
    for fi, fo in [(256, 256), (256, NUM_CLASSES)]:
        bound = 1.0 / jnp.sqrt(jnp.float32(fi))
        w = jax.random.uniform(next(keys), (fi, fo), jnp.float32, -bound, bound)
        b = jax.random.uniform(next(keys), (fo,), jnp.float32, -bound, bound)
        cls.append((w, b))
    return feats, cls


def fold_params(feats, cls):
    """Fold eval-mode BN into the Linears, fold the affine classifier pair, transpose to
    weights-stationary (fo, fi) layout with biases as (fo, 1) columns."""
    kparams = []
    for li, (w, b, gamma, beta, rmean, rvar) in enumerate(feats):
        scale = gamma / jnp.sqrt(rvar + BN_EPS)                     # (fo,)
        wf = (w * scale[None, :]).T                                 # (fo, fi)
        bf = ((b - rmean) * scale + beta)[:, None]                  # (fo, 1)
        if li == 0:
            kparams += [wf.astype(jnp.float32), bf]                 # broadcast layer stays f32
        else:
            kparams += [wf.astype(jnp.bfloat16), bf]
    (wc1, bc1), (wc2, bc2) = cls
    wc = (wc1 @ wc2).T                                              # (2, 256), exact in eval mode
    bc = (bc1 @ wc2 + bc2)[:, None]                                 # (2, 1)
    kparams += [wc.astype(jnp.bfloat16), bc]
    return kparams


# ----------------------------------------------------------------------------- references
def reference_f32(x, feats, cls):
    """Original (intended) architecture, pure f32, eval-mode BN/Dropout."""
    h = x.astype(jnp.float32)
    for (w, b, gamma, beta, rmean, rvar) in feats:
        h = h @ w + b
        h = (h - rmean) / jnp.sqrt(rvar + BN_EPS) * gamma + beta
        h = jnp.maximum(h, 0.0)
    (wc1, bc1), (wc2, bc2) = cls
    h = h @ wc1 + bc1                     # Dropout = identity in eval
    logits = h @ wc2 + bc2
    return jax.nn.log_softmax(logits, axis=-1)


def reference_mirror(x, kparams):
    """Exact mirror of the kernel math (folded params, batch-on-lanes, bf16 matmuls, bf16 out)."""
    (w1, b1, w2, b2, w3, b3, w4, b4, wc, bc) = kparams
    h = jnp.maximum(w1 * x.astype(jnp.float32).reshape(1, -1) + b1, 0.0)     # (32, N)
    for w, b in [(w2, b2), (w3, b3), (w4, b4)]:
        h = jnp.maximum(jnp.dot(w, h.astype(jnp.bfloat16),
                                preferred_element_type=jnp.float32) + b, 0.0)
    logits = jnp.dot(wc, h.astype(jnp.bfloat16),
                     preferred_element_type=jnp.float32) + bc                # (2, N)
    lp = jax.nn.log_softmax(logits, axis=0)
    return lp.astype(jnp.bfloat16).astype(jnp.float32).T                     # (N, 2)


# ----------------------------------------------------------------------------- main
if __name__ == "__main__":
    key = jax.random.PRNGKey(0)
    k_x, k_p = jax.random.split(key)

    N = 300                                   # small batch; wrapper picks tile=256 -> 2-step grid
    x = jax.random.normal(k_x, (N, 1), jnp.float32)
    feats, cls = make_raw_params(k_p)
    kparams = fold_params(feats, cls)

    out = qcnet_forward(x, kparams)
    out = jax.block_until_ready(out)
    assert out.shape == (N, NUM_CLASSES)
    assert bool(jnp.all(jnp.isfinite(out)))

    ref_m = reference_mirror(x, kparams)
    ref_f = reference_f32(x, feats, cls)
    assert jnp.allclose(out, ref_m, atol=2e-2, rtol=2e-2), "mismatch vs bf16 mirror reference"
    assert jnp.allclose(out, ref_f, atol=1e-1), "mismatch vs f32 original-arch reference"

    print("KERNEL_OK")
</pallas_src>

<mosaic_0001>
module attributes {stable_mosaic.version = 11 : i64} {
  func.func @qcnet_kernel(%arg0: i32, %arg1: memref<1x256xf32, #tpu.memory_space<vmem>>, %arg2: memref<32x1xf32, #tpu.memory_space<vmem>>, %arg3: memref<32x1xf32, #tpu.memory_space<vmem>>, %arg4: memref<64x32xbf16, #tpu.memory_space<vmem>>, %arg5: memref<64x1xf32, #tpu.memory_space<vmem>>, %arg6: memref<128x64xbf16, #tpu.memory_space<vmem>>, %arg7: memref<128x1xf32, #tpu.memory_space<vmem>>, %arg8: memref<256x128xbf16, #tpu.memory_space<vmem>>, %arg9: memref<256x1xf32, #tpu.memory_space<vmem>>, %arg10: memref<2x256xbf16, #tpu.memory_space<vmem>>, %arg11: memref<2x1xf32, #tpu.memory_space<vmem>>, %arg12: memref<2x256xbf16, #tpu.memory_space<vmem>>) attributes {dimension_semantics = [#tpu.dimension_semantics<parallel>], iteration_bounds = array<i64: 2>, scalar_prefetch = 0 : i64, scratch_operands = 0 : i64, tpu.core_type = #tpu.core_type<tc>, window_params = [{transform_indices = @transform_0, window_bounds = array<i64: 1, 256>}, {pipeline_mode = #tpu.pipeline_mode<synchronous>, transform_indices = @transform_1, window_bounds = array<i64: 32, 1>}, {pipeline_mode = #tpu.pipeline_mode<synchronous>, transform_indices = @transform_2, window_bounds = array<i64: 32, 1>}, {pipeline_mode = #tpu.pipeline_mode<synchronous>, transform_indices = @transform_3, window_bounds = array<i64: 64, 32>}, {pipeline_mode = #tpu.pipeline_mode<synchronous>, transform_indices = @transform_4, window_bounds = array<i64: 64, 1>}, {pipeline_mode = #tpu.pipeline_mode<synchronous>, transform_indices = @transform_5, window_bounds = array<i64: 128, 64>}, {pipeline_mode = #tpu.pipeline_mode<synchronous>, transform_indices = @transform_6, window_bounds = array<i64: 128, 1>}, {pipeline_mode = #tpu.pipeline_mode<synchronous>, transform_indices = @transform_7, window_bounds = array<i64: 256, 128>}, {pipeline_mode = #tpu.pipeline_mode<synchronous>, transform_indices = @transform_8, window_bounds = array<i64: 256, 1>}, {pipeline_mode = #tpu.pipeline_mode<synchronous>, transform_indices = @transform_9, window_bounds = array<i64: 2, 256>}, {pipeline_mode = #tpu.pipeline_mode<synchronous>, transform_indices = @transform_10, window_bounds = array<i64: 2, 1>}, {transform_indices = @transform_11, window_bounds = array<i64: 2, 256>}]} {
    %c0 = arith.constant 0 : index
    %c0_0 = arith.constant 0 : index
    %0 = vector.load %arg1[%c0, %c0_0] : memref<1x256xf32, #tpu.memory_space<vmem>>, vector<1x256xf32>
    %c0_1 = arith.constant 0 : index
    %c0_2 = arith.constant 0 : index
    %1 = vector.load %arg2[%c0_1, %c0_2] : memref<32x1xf32, #tpu.memory_space<vmem>>, vector<32x1xf32>
    %2 = vector.broadcast %1 : vector<32x1xf32> to vector<32x256xf32>
    %3 = vector.broadcast %0 : vector<1x256xf32> to vector<32x256xf32>
    %4 = arith.mulf %2, %3 : vector<32x256xf32>
    %c0_3 = arith.constant 0 : index
    %c0_4 = arith.constant 0 : index
    %5 = vector.load %arg3[%c0_3, %c0_4] : memref<32x1xf32, #tpu.memory_space<vmem>>, vector<32x1xf32>
    %6 = vector.broadcast %5 : vector<32x1xf32> to vector<32x256xf32>
    %7 = arith.addf %4, %6 : vector<32x256xf32>
    %cst = arith.constant 0.000000e+00 : f32
    %8 = vector.broadcast %cst : f32 to vector<32x256xf32>
    %9 = arith.maximumf %7, %8 : vector<32x256xf32>
    %c0_5 = arith.constant 0 : index
    %c0_6 = arith.constant 0 : index
    %10 = vector.load %arg4[%c0_5, %c0_6] : memref<64x32xbf16, #tpu.memory_space<vmem>>, vector<64x32xbf16>
    %11 = arith.truncf %9 : vector<32x256xf32> to vector<32x256xbf16>
    %cst_7 = arith.constant dense<0.000000e+00> : vector<64x256xf32>
    %12 = tpu.matmul %10, %11, %cst_7 {dimension_numbers = #tpu.dot_dimension_numbers<[1], [0], [0], [1], [0, 0, 1, 1], [], []>} : vector<64x32xbf16>, vector<32x256xbf16>, vector<64x256xf32> -> vector<64x256xf32>
    %c0_8 = arith.constant 0 : index
    %c0_9 = arith.constant 0 : index
    %13 = vector.load %arg5[%c0_8, %c0_9] : memref<64x1xf32, #tpu.memory_space<vmem>>, vector<64x1xf32>
    %14 = vector.broadcast %13 : vector<64x1xf32> to vector<64x256xf32>
    %15 = arith.addf %12, %14 : vector<64x256xf32>
    %cst_10 = arith.constant 0.000000e+00 : f32
    %16 = vector.broadcast %cst_10 : f32 to vector<64x256xf32>
    %17 = arith.maximumf %15, %16 : vector<64x256xf32>
    %c0_11 = arith.constant 0 : index
    %c0_12 = arith.constant 0 : index
    %18 = vector.load %arg6[%c0_11, %c0_12] : memref<128x64xbf16, #tpu.memory_space<vmem>>, vector<128x64xbf16>
    %19 = arith.truncf %17 : vector<64x256xf32> to vector<64x256xbf16>
    %cst_13 = arith.constant dense<0.000000e+00> : vector<128x256xf32>
    %20 = tpu.matmul %18, %19, %cst_13 {dimension_numbers = #tpu.dot_dimension_numbers<[1], [0], [0], [1], [0, 0, 1, 1], [], []>} : vector<128x64xbf16>, vector<64x256xbf16>, vector<128x256xf32> -> vector<128x256xf32>
    %c0_14 = arith.constant 0 : index
    %c0_15 = arith.constant 0 : index
    %21 = vector.load %arg7[%c0_14, %c0_15] : memref<128x1xf32, #tpu.memory_space<vmem>>, vector<128x1xf32>
    %22 = vector.broadcast %21 : vector<128x1xf32> to vector<128x256xf32>
    %23 = arith.addf %20, %22 : vector<128x256xf32>
    %cst_16 = arith.constant 0.000000e+00 : f32
    %24 = vector.broadcast %cst_16 : f32 to vector<128x256xf32>
    %25 = arith.maximumf %23, %24 : vector<128x256xf32>
    %c0_17 = arith.constant 0 : index
    %c0_18 = arith.constant 0 : index
    %26 = vector.load %arg8[%c0_17, %c0_18] : memref<256x128xbf16, #tpu.memory_space<vmem>>, vector<256x128xbf16>
    %27 = arith.truncf %25 : vector<128x256xf32> to vector<128x256xbf16>
    %cst_19 = arith.constant dense<0.000000e+00> : vector<256x256xf32>
    %28 = tpu.matmul %26, %27, %cst_19 {dimension_numbers = #tpu.dot_dimension_numbers<[1], [0], [0], [1], [0, 0, 1, 1], [], []>} : vector<256x128xbf16>, vector<128x256xbf16>, vector<256x256xf32> -> vector<256x256xf32>
    %c0_20 = arith.constant 0 : index
    %c0_21 = arith.constant 0 : index
    %29 = vector.load %arg9[%c0_20, %c0_21] : memref<256x1xf32, #tpu.memory_space<vmem>>, vector<256x1xf32>
    %30 = vector.broadcast %29 : vector<256x1xf32> to vector<256x256xf32>
    %31 = arith.addf %28, %30 : vector<256x256xf32>
    %cst_22 = arith.constant 0.000000e+00 : f32
    %32 = vector.broadcast %cst_22 : f32 to vector<256x256xf32>
    %33 = arith.maximumf %31, %32 : vector<256x256xf32>
    %c0_23 = arith.constant 0 : index
    %c0_24 = arith.constant 0 : index
    %34 = vector.load %arg10[%c0_23, %c0_24] : memref<2x256xbf16, #tpu.memory_space<vmem>>, vector<2x256xbf16>
    %35 = arith.truncf %33 : vector<256x256xf32> to vector<256x256xbf16>
    %cst_25 = arith.constant dense<0.000000e+00> : vector<2x256xf32>
    %36 = tpu.matmul %34, %35, %cst_25 {dimension_numbers = #tpu.dot_dimension_numbers<[1], [0], [0], [1], [0, 0, 1, 1], [], []>} : vector<2x256xbf16>, vector<256x256xbf16>, vector<2x256xf32> -> vector<2x256xf32>
    %c0_26 = arith.constant 0 : index
    %c0_27 = arith.constant 0 : index
    %37 = vector.load %arg11[%c0_26, %c0_27] : memref<2x1xf32, #tpu.memory_space<vmem>>, vector<2x1xf32>
    %38 = vector.broadcast %37 : vector<2x1xf32> to vector<2x256xf32>
    %39 = arith.addf %36, %38 : vector<2x256xf32>
    %cst_28 = arith.constant dense<0xFF800000> : vector<256xf32>
    %40 = vector.multi_reduction <maximumf>, %39, %cst_28 [0] : vector<2x256xf32> to vector<256xf32>
    %41 = vector.shape_cast %40 : vector<256xf32> to vector<1x256xf32>
    %42 = vector.broadcast %41 : vector<1x256xf32> to vector<2x256xf32>
    %43 = arith.subf %39, %42 : vector<2x256xf32>
    %44 = math.exp %43 : vector<2x256xf32>
    %cst_29 = arith.constant dense<0.000000e+00> : vector<256xf32>
    %45 = vector.multi_reduction <add>, %44, %cst_29 [0] : vector<2x256xf32> to vector<256xf32>
    %46 = vector.shape_cast %45 : vector<256xf32> to vector<1x256xf32>
    %47 = math.log %46 : vector<1x256xf32>
    %48 = vector.broadcast %47 : vector<1x256xf32> to vector<2x256xf32>
    %49 = arith.subf %43, %48 : vector<2x256xf32>
    %50 = arith.truncf %49 : vector<2x256xf32> to vector<2x256xbf16>
    %c0_30 = arith.constant 0 : index
    %c0_31 = arith.constant 0 : index
    %51 = vector.load %arg12[%c0_30, %c0_31] : memref<2x256xbf16, #tpu.memory_space<vmem>>, vector<2x256xbf16>
    tpu.vector_store %arg12[%c0_30, %c0_31], %50 {strides = array<i32>} : memref<2x256xbf16, #tpu.memory_space<vmem>>, vector<2x256xbf16>,
    return
  }
  func.func @transform_0(%arg0: i32) -> (i32, i32) {
    %c0_i32 = arith.constant 0 : i32
    %c0_i32_0 = arith.constant 0 : i32
    return %c0_i32, %arg0 : i32, i32
  }
  func.func @transform_1(%arg0: i32) -> (i32, i32) {
    %c0_i32 = arith.constant 0 : i32
    %c0_i32_0 = arith.constant 0 : i32
    %c0_i32_1 = arith.constant 0 : i32
    return %c0_i32, %c0_i32_0 : i32, i32
  }
  func.func @transform_2(%arg0: i32) -> (i32, i32) {
    %c0_i32 = arith.constant 0 : i32
    %c0_i32_0 = arith.constant 0 : i32
    %c0_i32_1 = arith.constant 0 : i32
    return %c0_i32, %c0_i32_0 : i32, i32
  }
  func.func @transform_3(%arg0: i32) -> (i32, i32) {
    %c0_i32 = arith.constant 0 : i32
    %c0_i32_0 = arith.constant 0 : i32
    %c0_i32_1 = arith.constant 0 : i32
    return %c0_i32, %c0_i32_0 : i32, i32
  }
  func.func @transform_4(%arg0: i32) -> (i32, i32) {
    %c0_i32 = arith.constant 0 : i32
    %c0_i32_0 = arith.constant 0 : i32
    %c0_i32_1 = arith.constant 0 : i32
    return %c0_i32, %c0_i32_0 : i32, i32
  }
  func.func @transform_5(%arg0: i32) -> (i32, i32) {
    %c0_i32 = arith.constant 0 : i32
    %c0_i32_0 = arith.constant 0 : i32
    %c0_i32_1 = arith.constant 0 : i32
    return %c0_i32, %c0_i32_0 : i32, i32
  }
  func.func @transform_6(%arg0: i32) -> (i32, i32) {
    %c0_i32 = arith.constant 0 : i32
    %c0_i32_0 = arith.constant 0 : i32
    %c0_i32_1 = arith.constant 0 : i32
    return %c0_i32, %c0_i32_0 : i32, i32
  }
  func.func @transform_7(%arg0: i32) -> (i32, i32) {
    %c0_i32 = arith.constant 0 : i32
    %c0_i32_0 = arith.constant 0 : i32
    %c0_i32_1 = arith.constant 0 : i32
    return %c0_i32, %c0_i32_0 : i32, i32
  }
  func.func @transform_8(%arg0: i32) -> (i32, i32) {
    %c0_i32 = arith.constant 0 : i32
    %c0_i32_0 = arith.constant 0 : i32
    %c0_i32_1 = arith.constant 0 : i32
    return %c0_i32, %c0_i32_0 : i32, i32
  }
  func.func @transform_9(%arg0: i32) -> (i32, i32) {
    %c0_i32 = arith.constant 0 : i32
    %c0_i32_0 = arith.constant 0 : i32
    %c0_i32_1 = arith.constant 0 : i32
    return %c0_i32, %c0_i32_0 : i32, i32
  }
  func.func @transform_10(%arg0: i32) -> (i32, i32) {
    %c0_i32 = arith.constant 0 : i32
    %c0_i32_0 = arith.constant 0 : i32
    %c0_i32_1 = arith.constant 0 : i32
    return %c0_i32, %c0_i32_0 : i32, i32
  }
  func.func @transform_11(%arg0: i32) -> (i32, i32) {
    %c0_i32 = arith.constant 0 : i32
    %c0_i32_0 = arith.constant 0 : i32
    return %c0_i32, %arg0 : i32, i32
  }
}

</mosaic_0001>

<llo_original>
// kernel: tpu_custom_call.1
$region0: #{tpu_custom_call.1}
  #allocation0 [shape = 'u32[]', space=smem, size = 0x4, offset = 0x4, fixed_abs, tag = 'smem constant byte address 0x4 - core index']
  #allocation1 [shape = 'u32[144,128]{1,0:T(1,128)}', space=vmem, size = 0x12000, scoped, tag = 'internal scratch']
  %s0 = inlined_call_operand.vmem [shape: f32[1,512], index: 0, kind: input, shape index: {}]
  %s1 = inlined_call_operand.vmem [shape: f32[32,1], index: 1, kind: input, shape index: {}]
  %s2 = inlined_call_operand.vmem [shape: f32[32,1], index: 2, kind: input, shape index: {}]
  %s3 = inlined_call_operand.vmem [shape: bf16[64,32], index: 3, kind: input, shape index: {}]
  %s4 = inlined_call_operand.vmem [shape: f32[64,1], index: 4, kind: input, shape index: {}]
  %s5 = inlined_call_operand.vmem [shape: bf16[128,64], index: 5, kind: input, shape index: {}]
  %s6 = inlined_call_operand.vmem [shape: f32[128,1], index: 6, kind: input, shape index: {}]
  %s7 = inlined_call_operand.vmem [shape: bf16[256,128], index: 7, kind: input, shape index: {}]
  %s8 = inlined_call_operand.vmem [shape: f32[256,1], index: 8, kind: input, shape index: {}]
  %s9 = inlined_call_operand.vmem [shape: bf16[2,256], index: 9, kind: input, shape index: {}]
  %s10 = inlined_call_operand.vmem [shape: f32[2,1], index: 10, kind: input, shape index: {}]
  %s11 = inlined_call_operand.hbm [shape: bf16[2,512], index: 11, kind: output, shape index: {}]
  %s12 = sld [smem:[#allocation0]]
  $region77: #{tpu_custom_call.1} parent=0
    _
  %s14 = ssub.s32 1, %s12
  %s15 = scalar_select 0, %s14, %s12
  $region1: #{tpu_custom_call.1} parent=0
    #allocation2 [shape = 'u8[2048]{0}', space=vmem, size = 0x800, scoped, tag = 'output window, operand 0']
    #allocation3 [shape = 's32[2]{0}', space=sflag, size = 0x8, scoped, tag = 'scoped memory for tpu_custom_call.1']
    %16 = vsyncpa [#allocation3], 0
    %s17 = scalar_lea.sflag [#allocation3], 1
    %18 = vsyncpa %s17, 0
    loop: start=0, step=1, limit=4
    $region2: #{tpu_custom_call.1} parent=1 // loop_pre_header
      _
    $region3: #{tpu_custom_call.1} parent=1 // loop_header
      %s20 = sphi 0, %s24
      %p21 = scmp.ge.s32.totalorder %s20, 4
      %s30 = sphi 0, %s32
      %s33 = sphi 0, %s30
      %s34 = sphi 0, %s33
      %s50 = sphi 0, %s34
      %s54 = sphi 0, %s54
      %s56 = sphi 0, %s54
      %s57 = sphi 0, %s56
      %s71 = sphi 0, %s57
      %s75 = sphi 0, %s75
      %s77 = sphi 0, %s75
      %s78 = sphi 0, %s77
      %s92 = sphi 0, %s78
      %s96 = sphi 0, %s96
      %s98 = sphi 0, %s96
      %s99 = sphi 0, %s98
      %s113 = sphi 0, %s99
      %s117 = sphi 0, %s117
      %s119 = sphi 0, %s117
      %s120 = sphi 0, %s119
      %s134 = sphi 0, %s120
      %s138 = sphi 0, %s138
      %s140 = sphi 0, %s138
      %s141 = sphi 0, %s140
      %s155 = sphi 0, %s141
      %s159 = sphi 0, %s159
      %s161 = sphi 0, %s159
      %s162 = sphi 0, %s161
      %s176 = sphi 0, %s162
      %s180 = sphi 0, %s180
      %s182 = sphi 0, %s180
      %s183 = sphi 0, %s182
      %s197 = sphi 0, %s183
      %s201 = sphi 0, %s201
      %s203 = sphi 0, %s201
      %s204 = sphi 0, %s203
      %s218 = sphi 0, %s204
      %s222 = sphi 0, %s222
      %s224 = sphi 0, %s222
      %s225 = sphi 0, %s224
      %s239 = sphi 0, %s225
      %s243 = sphi 0, %s243
      %s245 = sphi 0, %s243
      %s246 = sphi 0, %s245
      %s260 = sphi 0, %s246
      %s266 = sphi 0, %s268
      %s269 = sphi 0, %s266
      %s270 = sphi 0, %s269
      %s286 = sphi 0, %s270
    $region4: #{tpu_custom_call.1} parent=1 // loop_header_branch
      %23 = sbr.rel (%p21) target = $region8
    $region5: #{tpu_custom_call.1} parent=1 // loop_body
      %s25 = ssub.s32 %s20, 1
      %s26 = ssub.s32 %s20, 2
      %s27 = sadd.s32 %s20, 1
      %s28 = ssub.s32 %s20, %s27
      %p29 = scmp.eq.s32.totalorder %s28, 0
      %s31 = sadd.s32 %s30, 1
      %s32 = scalar_select %p29, %s30, %s31
      %p35 = pneg %p29
      %p36 = scmp.eq.s32.totalorder %s20, 1
      %p37 = por %p35, %p36
      %p38 = scmp.ne.s32.totalorder %s30, %s33
      %p39 = scmp.eq.s32.totalorder %s20, 0
      %p40 = por %p38, %p39
      %p41 = scmp.ne.s32.totalorder %s30, %s33
      %p42 = scmp.eq.s32.totalorder %s25, 1
      %p43 = por %p41, %p42
      %p44 = scmp.ne.s32.totalorder %s33, %s34
      %p45 = scmp.eq.s32.totalorder %s25, 0
      %p46 = por %p44, %p45
      %p47 = scmp.ne.s32.totalorder %s33, %s34
      %p48 = scmp.eq.s32.totalorder %s26, 1
      %p49 = por %p47, %p48
      %p51 = scmp.ne.s32.totalorder %s34, %s50
      %p52 = scmp.eq.s32.totalorder %s26, 0
      %p53 = por %p51, %p52
      %s55 = sadd.s32 %s54, 1
      %p58 = scmp.eq.s32.totalorder %s20, 1
      %p59 = scmp.ne.s32.totalorder %s54, %s56
      %p60 = scmp.eq.s32.totalorder %s20, 0
      %p61 = por %p59, %p60
      %p62 = scmp.ne.s32.totalorder %s54, %s56
      %p63 = scmp.eq.s32.totalorder %s25, 1
      %p64 = por %p62, %p63
      %p65 = scmp.ne.s32.totalorder %s56, %s57
      %p66 = scmp.eq.s32.totalorder %s25, 0
      %p67 = por %p65, %p66
      %p68 = scmp.ne.s32.totalorder %s56, %s57
      %p69 = scmp.eq.s32.totalorder %s26, 1
      %p70 = por %p68, %p69
      %p72 = scmp.ne.s32.totalorder %s57, %s71
      %p73 = scmp.eq.s32.totalorder %s26, 0
      %p74 = por %p72, %p73
      %s76 = sadd.s32 %s75, 1
      %p79 = scmp.eq.s32.totalorder %s20, 1
      %p80 = scmp.ne.s32.totalorder %s75, %s77
      %p81 = scmp.eq.s32.totalorder %s20, 0
      %p82 = por %p80, %p81
      %p83 = scmp.ne.s32.totalorder %s75, %s77
      %p84 = scmp.eq.s32.totalorder %s25, 1
      %p85 = por %p83, %p84
      %p86 = scmp.ne.s32.totalorder %s77, %s78
      %p87 = scmp.eq.s32.totalorder %s25, 0
      %p88 = por %p86, %p87
      %p89 = scmp.ne.s32.totalorder %s77, %s78
      %p90 = scmp.eq.s32.totalorder %s26, 1
      %p91 = por %p89, %p90
      %p93 = scmp.ne.s32.totalorder %s78, %s92
      %p94 = scmp.eq.s32.totalorder %s26, 0
      %p95 = por %p93, %p94
      %s97 = sadd.s32 %s96, 1
      %p100 = scmp.eq.s32.totalorder %s20, 1
      %p101 = scmp.ne.s32.totalorder %s96, %s98
      %p102 = scmp.eq.s32.totalorder %s20, 0
      %p103 = por %p101, %p102
      %p104 = scmp.ne.s32.totalorder %s96, %s98
      %p105 = scmp.eq.s32.totalorder %s25, 1
      %p106 = por %p104, %p105
      %p107 = scmp.ne.s32.totalorder %s98, %s99
      %p108 = scmp.eq.s32.totalorder %s25, 0
      %p109 = por %p107, %p108
      %p110 = scmp.ne.s32.totalorder %s98, %s99
      %p111 = scmp.eq.s32.totalorder %s26, 1
      %p112 = por %p110, %p111
      %p114 = scmp.ne.s32.totalorder %s99, %s113
      %p115 = scmp.eq.s32.totalorder %s26, 0
      %p116 = por %p114, %p115
      %s118 = sadd.s32 %s117, 1
      %p121 = scmp.eq.s32.totalorder %s20, 1
      %p122 = scmp.ne.s32.totalorder %s117, %s119
      %p123 = scmp.eq.s32.totalorder %s20, 0
      %p124 = por %p122, %p123
      %p125 = scmp.ne.s32.totalorder %s117, %s119
      %p126 = scmp.eq.s32.totalorder %s25, 1
      %p127 = por %p125, %p126
      %p128 = scmp.ne.s32.totalorder %s119, %s120
      %p129 = scmp.eq.s32.totalorder %s25, 0
      %p130 = por %p128, %p129
      %p131 = scmp.ne.s32.totalorder %s119, %s120
      %p132 = scmp.eq.s32.totalorder %s26, 1
      %p133 = por %p131, %p132
      %p135 = scmp.ne.s32.totalorder %s120, %s134
      %p136 = scmp.eq.s32.totalorder %s26, 0
      %p137 = por %p135, %p136
      %s139 = sadd.s32 %s138, 1
      %p142 = scmp.eq.s32.totalorder %s20, 1
      %p143 = scmp.ne.s32.totalorder %s138, %s140
      %p144 = scmp.eq.s32.totalorder %s20, 0
      %p145 = por %p143, %p144
      %p146 = scmp.ne.s32.totalorder %s138, %s140
      %p147 = scmp.eq.s32.totalorder %s25, 1
      %p148 = por %p146, %p147
      %p149 = scmp.ne.s32.totalorder %s140, %s141
      %p150 = scmp.eq.s32.totalorder %s25, 0
      %p151 = por %p149, %p150
      %p152 = scmp.ne.s32.totalorder %s140, %s141
      %p153 = scmp.eq.s32.totalorder %s26, 1
      %p154 = por %p152, %p153
      %p156 = scmp.ne.s32.totalorder %s141, %s155
      %p157 = scmp.eq.s32.totalorder %s26, 0
      %p158 = por %p156, %p157
      %s160 = sadd.s32 %s159, 1
      %p163 = scmp.eq.s32.totalorder %s20, 1
      %p164 = scmp.ne.s32.totalorder %s159, %s161
      %p165 = scmp.eq.s32.totalorder %s20, 0
      %p166 = por %p164, %p165
      %p167 = scmp.ne.s32.totalorder %s159, %s161
      %p168 = scmp.eq.s32.totalorder %s25, 1
      %p169 = por %p167, %p168
      %p170 = scmp.ne.s32.totalorder %s161, %s162
      %p171 = scmp.eq.s32.totalorder %s25, 0
      %p172 = por %p170, %p171
      %p173 = scmp.ne.s32.totalorder %s161, %s162
      %p174 = scmp.eq.s32.totalorder %s26, 1
      %p175 = por %p173, %p174
      %p177 = scmp.ne.s32.totalorder %s162, %s176
      %p178 = scmp.eq.s32.totalorder %s26, 0
      %p179 = por %p177, %p178
      %s181 = sadd.s32 %s180, 1
      %p184 = scmp.eq.s32.totalorder %s20, 1
      %p185 = scmp.ne.s32.totalorder %s180, %s182
      %p186 = scmp.eq.s32.totalorder %s20, 0
      %p187 = por %p185, %p186
      %p188 = scmp.ne.s32.totalorder %s180, %s182
      %p189 = scmp.eq.s32.totalorder %s25, 1
      %p190 = por %p188, %p189
      %p191 = scmp.ne.s32.totalorder %s182, %s183
      %p192 = scmp.eq.s32.totalorder %s25, 0
      %p193 = por %p191, %p192
      %p194 = scmp.ne.s32.totalorder %s182, %s183
      %p195 = scmp.eq.s32.totalorder %s26, 1
      %p196 = por %p194, %p195
      %p198 = scmp.ne.s32.totalorder %s183, %s197
      %p199 = scmp.eq.s32.totalorder %s26, 0
      %p200 = por %p198, %p199
      %s202 = sadd.s32 %s201, 1
      %p205 = scmp.eq.s32.totalorder %s20, 1
      %p206 = scmp.ne.s32.totalorder %s201, %s203
      %p207 = scmp.eq.s32.totalorder %s20, 0
      %p208 = por %p206, %p207
      %p209 = scmp.ne.s32.totalorder %s201, %s203
      %p210 = scmp.eq.s32.totalorder %s25, 1
      %p211 = por %p209, %p210
      %p212 = scmp.ne.s32.totalorder %s203, %s204
      %p213 = scmp.eq.s32.totalorder %s25, 0
      %p214 = por %p212, %p213
      %p215 = scmp.ne.s32.totalorder %s203, %s204
      %p216 = scmp.eq.s32.totalorder %s26, 1
      %p217 = por %p215, %p216
      %p219 = scmp.ne.s32.totalorder %s204, %s218
      %p220 = scmp.eq.s32.totalorder %s26, 0
      %p221 = por %p219, %p220
      %s223 = sadd.s32 %s222, 1
      %p226 = scmp.eq.s32.totalorder %s20, 1
      %p227 = scmp.ne.s32.totalorder %s222, %s224
      %p228 = scmp.eq.s32.totalorder %s20, 0
      %p229 = por %p227, %p228
      %p230 = scmp.ne.s32.totalorder %s222, %s224
      %p231 = scmp.eq.s32.totalorder %s25, 1
      %p232 = por %p230, %p231
      %p233 = scmp.ne.s32.totalorder %s224, %s225
      %p234 = scmp.eq.s32.totalorder %s25, 0
      %p235 = por %p233, %p234
      %p236 = scmp.ne.s32.totalorder %s224, %s225
      %p237 = scmp.eq.s32.totalorder %s26, 1
      %p238 = por %p236, %p237
      %p240 = scmp.ne.s32.totalorder %s225, %s239
      %p241 = scmp.eq.s32.totalorder %s26, 0
      %p242 = por %p240, %p241
      %s244 = sadd.s32 %s243, 1
      %p247 = scmp.eq.s32.totalorder %s20, 1
      %p248 = scmp.ne.s32.totalorder %s243, %s245
      %p249 = scmp.eq.s32.totalorder %s20, 0
      %p250 = por %p248, %p249
      %p251 = scmp.ne.s32.totalorder %s243, %s245
      %p252 = scmp.eq.s32.totalorder %s25, 1
      %p253 = por %p251, %p252
      %p254 = scmp.ne.s32.totalorder %s245, %s246
      %p255 = scmp.eq.s32.totalorder %s25, 0
      %p256 = por %p254, %p255
      %p257 = scmp.ne.s32.totalorder %s245, %s246
      %p258 = scmp.eq.s32.totalorder %s26, 1
      %p259 = por %p257, %p258
      %p261 = scmp.ne.s32.totalorder %s246, %s260
      %p262 = scmp.eq.s32.totalorder %s26, 0
      %p263 = por %p261, %p262
      %s264 = ssub.s32 %s20, %s27
      %p265 = scmp.eq.s32.totalorder %s264, 0
      %s267 = sadd.s32 %s266, 1
      %s268 = scalar_select %p265, %s266, %s267
      %p271 = pneg %p265
      %p272 = scmp.eq.s32.totalorder %s20, 1
      %p273 = por %p271, %p272
      %p274 = scmp.ne.s32.totalorder %s266, %s269
      %p275 = scmp.eq.s32.totalorder %s20, 0
      %p276 = por %p274, %p275
      %p277 = scmp.ne.s32.totalorder %s266, %s269
      %p278 = scmp.eq.s32.totalorder %s25, 1
      %p279 = por %p277, %p278
      %p280 = scmp.ne.s32.totalorder %s269, %s270
      %p281 = scmp.eq.s32.totalorder %s25, 0
      %p282 = por %p280, %p281
      %p283 = scmp.ne.s32.totalorder %s269, %s270
      %p284 = scmp.eq.s32.totalorder %s26, 1
      %p285 = por %p283, %p284
      %p287 = scmp.ne.s32.totalorder %s270, %s286
      %p288 = scmp.eq.s32.totalorder %s26, 0
      %p289 = por %p287, %p288
      %p290 = scmp.le.s32.totalorder 1, %s20
      %p291 = scmp.lt.s32.totalorder %s20, 3
      %p292 = pnand %p290, %p291
      %p293 = pneg %p292
      // Predicated region
      $region9: #{tpu_custom_call.1} parent=5 // pred_check
        _
      $region10: #{tpu_custom_call.1} parent=5 // pred_check_branch
        %295 = sbr.rel (%p292) target = $region12
      $region11: #{tpu_custom_call.1} parent=5 // pred_region
        %s296 = ssub.s32 %s20, 1
        // Predicated region
        $region13: #{tpu_custom_call.1} parent=11 // pred_check
          %p297 = pneg %p67
        $region14: #{tpu_custom_call.1} parent=11 // pred_check_branch
          %299 = sbr.rel (%p297) target = $region16
        $region15: #{tpu_custom_call.1} parent=11 // pred_region
          _
        $region16: #{tpu_custom_call.1} parent=11 // pred_fallthru
          _
        // Predicated region
        $region17: #{tpu_custom_call.1} parent=11 // pred_check
          %p300 = pneg %p88
        $region18: #{tpu_custom_call.1} parent=11 // pred_check_branch
          %302 = sbr.rel (%p300) target = $region20
        $region19: #{tpu_custom_call.1} parent=11 // pred_region
          _
        $region20: #{tpu_custom_call.1} parent=11 // pred_fallthru
          _
        // Predicated region
        $region21: #{tpu_custom_call.1} parent=11 // pred_check
          %p303 = pneg %p109
        $region22: #{tpu_custom_call.1} parent=11 // pred_check_branch
          %305 = sbr.rel (%p303) target = $region24
        $region23: #{tpu_custom_call.1} parent=11 // pred_region
          _
        $region24: #{tpu_custom_call.1} parent=11 // pred_fallthru
          _
        // Predicated region
        $region25: #{tpu_custom_call.1} parent=11 // pred_check
          %p306 = pneg %p130
        $region26: #{tpu_custom_call.1} parent=11 // pred_check_branch
          %308 = sbr.rel (%p306) target = $region28
        $region27: #{tpu_custom_call.1} parent=11 // pred_region
          _
        $region28: #{tpu_custom_call.1} parent=11 // pred_fallthru
          _
        // Predicated region
        $region29: #{tpu_custom_call.1} parent=11 // pred_check
          %p309 = pneg %p151
        $region30: #{tpu_custom_call.1} parent=11 // pred_check_branch
          %311 = sbr.rel (%p309) target = $region32
        $region31: #{tpu_custom_call.1} parent=11 // pred_region
          _
        $region32: #{tpu_custom_call.1} parent=11 // pred_fallthru
          _
        // Predicated region
        $region33: #{tpu_custom_call.1} parent=11 // pred_check
          %p312 = pneg %p172
        $region34: #{tpu_custom_call.1} parent=11 // pred_check_branch
          %314 = sbr.rel (%p312) target = $region36
        $region35: #{tpu_custom_call.1} parent=11 // pred_region
          _
        $region36: #{tpu_custom_call.1} parent=11 // pred_fallthru
          _
        // Predicated region
        $region37: #{tpu_custom_call.1} parent=11 // pred_check
          %p315 = pneg %p193
        $region38: #{tpu_custom_call.1} parent=11 // pred_check_branch
          %317 = sbr.rel (%p315) target = $region40
        $region39: #{tpu_custom_call.1} parent=11 // pred_region
          _
        $region40: #{tpu_custom_call.1} parent=11 // pred_fallthru
          _
        // Predicated region
        $region41: #{tpu_custom_call.1} parent=11 // pred_check
          %p318 = pneg %p214
        $region42: #{tpu_custom_call.1} parent=11 // pred_check_branch
          %320 = sbr.rel (%p318) target = $region44
        $region43: #{tpu_custom_call.1} parent=11 // pred_region
          _
        $region44: #{tpu_custom_call.1} parent=11 // pred_fallthru
          _
        // Predicated region
        $region45: #{tpu_custom_call.1} parent=11 // pred_check
          %p321 = pneg %p235
        $region46: #{tpu_custom_call.1} parent=11 // pred_check_branch
          %323 = sbr.rel (%p321) target = $region48
        $region47: #{tpu_custom_call.1} parent=11 // pred_region
          _
        $region48: #{tpu_custom_call.1} parent=11 // pred_fallthru
          _
        // Predicated region
        $region49: #{tpu_custom_call.1} parent=11 // pred_check
          %p324 = pneg %p256
        $region50: #{tpu_custom_call.1} parent=11 // pred_check_branch
          %326 = sbr.rel (%p324) target = $region52
        $region51: #{tpu_custom_call.1} parent=11 // pred_region
          _
        $region52: #{tpu_custom_call.1} parent=11 // pred_fallthru
          _
      $region12: #{tpu_custom_call.1} parent=5 // pred_fallthru
        _
      %p327 = scmp.lt.s32.totalorder %s20, 2
      // Predicated region
      $region53: #{tpu_custom_call.1} parent=5 // pred_check
        %p328 = pneg %p327
      $region54: #{tpu_custom_call.1} parent=5 // pred_check_branch
        %330 = sbr.rel (%p328) target = $region56
      $region55: #{tpu_custom_call.1} parent=5 // pred_region
        // Predicated region
        $region57: #{tpu_custom_call.1} parent=55 // pred_check
          %p331 = pneg %p40
        $region58: #{tpu_custom_call.1} parent=55 // pred_check_branch
          %333 = sbr.rel (%p331) target = $region60
        $region59: #{tpu_custom_call.1} parent=55 // pred_region
          %s334 = smul.u32 2, %s20
          %p335 = scmp.lt.s32.totalorder %s334, 3
          %s336 = scalar_select %p335, %s334, 3
          %s337 = scalar_lea.vmem %s0, %s336
          %s338 = smul.u32 2, %s20
        $region60: #{tpu_custom_call.1} parent=55 // pred_fallthru
          _
      $region56: #{tpu_custom_call.1} parent=5 // pred_fallthru
        _
      %p339 = scmp.le.s32.totalorder 1, %s20
      %p340 = scmp.lt.s32.totalorder %s20, 3
      %p341 = pnand %p339, %p340
      %p342 = pneg %p341
      // Predicated region
      $region61: #{tpu_custom_call.1} parent=5 // pred_check
        _
      $region62: #{tpu_custom_call.1} parent=5 // pred_check_branch
        %344 = sbr.rel (%p341) target = $region64
      $region63: #{tpu_custom_call.1} parent=5 // pred_region
        %s345 = ssub.s32 %s20, 1
        %s346 = smul.u32 2, %s25
        %p347 = scmp.lt.s32.totalorder %s346, 3
        %s348 = scalar_select %p347, %s346, 3
        %s349 = scalar_lea.vmem %s0, %s348
        %p350 = pneg %p46
        %p351 = pneg %p43
        %p352 = pneg %p67
        %p353 = pneg %p64
        %p354 = pneg %p88
        %p355 = pneg %p85
        %p356 = pneg %p109
        %p357 = pneg %p106
        %p358 = pneg %p130
        %p359 = pneg %p127
        %p360 = pneg %p151
        %p361 = pneg %p148
        %p362 = pneg %p172
        %p363 = pneg %p169
        %p364 = pneg %p193
        %p365 = pneg %p190
        %p366 = pneg %p214
        %p367 = pneg %p211
        %p368 = pneg %p235
        %p369 = pneg %p232
        %p370 = pneg %p256
        %p371 = pneg %p253
        %p372 = pneg %p282
        %p373 = pneg %p279
        %s374 = sand.u32 %s269, 1
        %s375 = scalar_lea.sflag [#allocation3], %s374
        %s376 = sand.u32 %s269, 1
        %s377 = smul.addr %s376, 2
        %s378 = scalar_lea.vmem [#allocation2], %s377
        %s379 = smul.u32 2, %s25
        %p380 = scmp.lt.s32.totalorder %s379, 3
        %s381 = scalar_select %p380, %s379, 3
        %s382 = scalar_lea.vmem %s0, %s381
        %s383 = smul.u32 2, %s25
        %s384 = smul.u32 2, %s25
        %v386 = vld [vmem:[%s382] sm:$0x3]
        %v387 = vld [vmem:[%s1] sm:$0xff]
        %v388 = vld [vmem:[%s1 + $0x8] sm:$0xff]
        %v389 = vld [vmem:[%s1 + $0x10] sm:$0xff]
        %v390 = vld [vmem:[%s1 + $0x18] sm:$0xff]
        %392 = vset.pattern.permute.xlu0 0
        %393 = vperm.xlu0 %392, %v387
        %v394 = vpop.permute.xlu0 %393
        %397 = vset.pattern.permute.xlu0 0
        %398 = vperm.xlu0 %397, %v388
        %v399 = vpop.permute.xlu0 %398
        %402 = vset.pattern.permute.xlu0 0
        %403 = vperm.xlu0 %402, %v389
        %v404 = vpop.permute.xlu0 %403
        %407 = vset.pattern.permute.xlu0 0
        %408 = vperm.xlu0 %407, %v390
        %v409 = vpop.permute.xlu0 %408
        %v412 = vlaneseq
        %v413 = vshrl.u32 %v412, 7
        %v414 = vsub.s32 0, %v413
        %v415 = vrot.slane %v386, %v414
        %v416 = vlaneseq
        %v417 = vshrl.u32 %v416, 7
        %v418 = vsub.s32 1, %v417
        %v419 = vrot.slane %v386, %v418
        %v422 = vmul.f32 %v394, %v415
        %v423 = vmul.f32 %v394, %v419
        %v424 = vmul.f32 %v399, %v415
        %v425 = vmul.f32 %v399, %v419
        %v426 = vmul.f32 %v404, %v415
        %v427 = vmul.f32 %v404, %v419
        %v428 = vmul.f32 %v409, %v415
        %v429 = vmul.f32 %v409, %v419
        %v430 = vld [vmem:[%s2] sm:$0xff]
        %v431 = vld [vmem:[%s2 + $0x8] sm:$0xff]
        %v432 = vld [vmem:[%s2 + $0x10] sm:$0xff]
        %v433 = vld [vmem:[%s2 + $0x18] sm:$0xff]
        %435 = vset.pattern.permute.xlu0 0
        %436 = vperm.xlu0 %435, %v430
        %v437 = vpop.permute.xlu0 %436
        %440 = vset.pattern.permute.xlu0 0
        %441 = vperm.xlu0 %440, %v431
        %v442 = vpop.permute.xlu0 %441
        %445 = vset.pattern.permute.xlu0 0
        %446 = vperm.xlu0 %445, %v432
        %v447 = vpop.permute.xlu0 %446
        %450 = vset.pattern.permute.xlu0 0
        %451 = vperm.xlu0 %450, %v433
        %v452 = vpop.permute.xlu0 %451
        %v454 = vadd.f32 %v422, %v437
        %v455 = vadd.f32 %v423, %v437
        %v456 = vadd.f32 %v424, %v442
        %v457 = vadd.f32 %v425, %v442
        %v458 = vadd.f32 %v426, %v447
        %v459 = vadd.f32 %v427, %v447
        %v460 = vadd.f32 %v428, %v452
        %v461 = vadd.f32 %v429, %v452
        %v462 = vmax.f32 %v454, 0.0
        %v463 = vmax.f32 %v455, 0.0
        %v464 = vmax.f32 %v456, 0.0
        %v465 = vmax.f32 %v457, 0.0
        %v466 = vmax.f32 %v458, 0.0
        %v467 = vmax.f32 %v459, 0.0
        %v468 = vmax.f32 %v460, 0.0
        %v469 = vmax.f32 %v461, 0.0
        %v470 = vld [vmem:[%s3] sm:$0xf]
        %v471 = vld [vmem:[%s3 + $0x4] sm:$0xf]
        %v472 = vld [vmem:[%s3 + $0x8] sm:$0xf]
        %v473 = vld [vmem:[%s3 + $0xc] sm:$0xf]
        %v474 = vld [vmem:[%s3 + $0x10] sm:$0xf]
        %v475 = vld [vmem:[%s3 + $0x14] sm:$0xf]
        %v476 = vld [vmem:[%s3 + $0x18] sm:$0xf]
        %v477 = vld [vmem:[%s3 + $0x1c] sm:$0xf]
        %v478 = vpack.c.bf16 %v464, %v462
        %v479 = vpack.c.bf16 %v465, %v463
        %v480 = vpack.c.bf16 %v468, %v466
        %v481 = vpack.c.bf16 %v469, %v467
        %v482 = vld [vmem:[%s4] sm:$0xff]
        %v483 = vld [vmem:[%s4 + $0x8] sm:$0xff]
        %v484 = vld [vmem:[%s4 + $0x10] sm:$0xff]
        %v485 = vld [vmem:[%s4 + $0x18] sm:$0xff]
        %v486 = vld [vmem:[%s4 + $0x20] sm:$0xff]
        %v487 = vld [vmem:[%s4 + $0x28] sm:$0xff]
        %v488 = vld [vmem:[%s4 + $0x30] sm:$0xff]
        %v489 = vld [vmem:[%s4 + $0x38] sm:$0xff]
        %491 = vset.pattern.permute.xlu0 0
        %492 = vperm.xlu0 %491, %v482
        %v493 = vpop.permute.xlu0 %492
        %496 = vset.pattern.permute.xlu0 0
        %497 = vperm.xlu0 %496, %v483
        %v498 = vpop.permute.xlu0 %497
        %501 = vset.pattern.permute.xlu0 0
        %502 = vperm.xlu0 %501, %v484
        %v503 = vpop.permute.xlu0 %502
        %506 = vset.pattern.permute.xlu0 0
        %507 = vperm.xlu0 %506, %v485
        %v508 = vpop.permute.xlu0 %507
        %511 = vset.pattern.permute.xlu0 0
        %512 = vperm.xlu0 %511, %v486
        %v513 = vpop.permute.xlu0 %512
        %516 = vset.pattern.permute.xlu0 0
        %517 = vperm.xlu0 %516, %v487
        %v518 = vpop.permute.xlu0 %517
        %521 = vset.pattern.permute.xlu0 0
        %522 = vperm.xlu0 %521, %v488
        %v523 = vpop.permute.xlu0 %522
        %526 = vset.pattern.permute.xlu0 0
        %527 = vperm.xlu0 %526, %v489
        %v528 = vpop.permute.xlu0 %527
        %v538 = vunpack.c.l.b16 %v470
        %v539 = vunpack.c.l.b16 %v471
        %v540 = vunpack.c.l.b16 %v472
        %v541 = vunpack.c.l.b16 %v473
        %v542 = vunpack.c.l.b16 %v474
        %v543 = vunpack.c.l.b16 %v475
        %v544 = vunpack.c.l.b16 %v476
        %v545 = vunpack.c.l.b16 %v477
        %v546 = vpack.c.b16 %v539, %v538
        %v547 = vpack.c.b16 %v541, %v540
        %v548 = vpack.c.b16 %v543, %v542
        %v549 = vpack.c.b16 %v545, %v544
        %vm550 = vcmask 261120
        %v552 = vsel %vm550, %v546, 0
        %v555 = vsel %vm550, %v547, 0
        %v558 = vsel %vm550, %v548, 0
        %v561 = vsel %vm550, %v549, 0
        %563 = vmatprep.subr.bf16.mxu0 %v479
        %564 = vmatpush1.bf16.msra.mxu0 %v478
        %565 = vmatprep.subr.bf16.mxu0 %v481
        %566 = vmatpush1.bf16.msra.mxu0 %v480
        %567 = vmatprep.subr.bf16.mxu0 0
        %568 = vmatpush1.bf16.msra.mxu0 0
        %569 = vmatprep.subr.bf16.mxu0 0
        %570 = vmatpush1.bf16.msra.mxu0 0
        %571 = vmatprep.subr.bf16.mxu0 0
        %572 = vmatpush1.bf16.msra.mxu0 0
        %573 = vmatprep.subr.bf16.mxu0 0
        %574 = vmatpush1.bf16.msra.mxu0 0
        %575 = vmatprep.subr.bf16.mxu0 0
        %576 = vmatpush1.bf16.msra.mxu0 0
        %577 = vmatprep.subr.bf16.mxu0 0
        %578 = vmatpush1.bf16.msra.mxu0 0
        %579 = vmatprep.subr.bf16.mxu0 0
        %580 = vmatpush1.bf16.msra.mxu0 0
        %581 = vmatprep.subr.bf16.mxu0 0
        %582 = vmatpush1.bf16.msra.mxu0 0
        %583 = vmatprep.subr.bf16.mxu0 0
        %584 = vmatpush1.bf16.msra.mxu0 0
        %585 = vmatprep.subr.bf16.mxu0 0
        %586 = vmatpush1.bf16.msra.mxu0 0
        %587 = vmatprep.subr.bf16.mxu0 0
        %588 = vmatpush1.bf16.msra.mxu0 0
        %589 = vmatprep.subr.bf16.mxu0 0
        %590 = vmatpush1.bf16.msra.mxu0 0
        %591 = vmatprep.subr.bf16.mxu0 0
        %592 = vmatpush1.bf16.msra.mxu0 0
        %593 = vmatprep.subr.bf16.mxu0 0
        %594 = vmatpush1.bf16.msra.mxu0 0
        %595 = vmatprep.mubr.bf16.mxu0 0
        %596 = vmatmul.mubr.bf16.gmra.mrb[0].mxu0 %v552
        %v597 = vpop.f32.mrb[0].mxu0
        %v598 = vadd.f32 %v493, %v597
        %v599 = vpop.f32.mrb[0].mxu0
        %v600 = vadd.f32 %v493, %v599
        %v601 = vpop.f32.mrb[0].mxu0
        %v602 = vadd.f32 %v498, %v601
        %v603 = vpop.f32.mrb[0].mxu0
        %v604 = vadd.f32 %v498, %v603
        %605 = vmatprep.mubr.bf16.mxu0 0
        %606 = vmatmul.mubr.bf16.gmra.mrb[0].mxu0 %v555
        %v607 = vpop.f32.mrb[0].mxu0
        %v608 = vadd.f32 %v503, %v607
        %v609 = vpop.f32.mrb[0].mxu0
        %v610 = vadd.f32 %v503, %v609
        %v611 = vpop.f32.mrb[0].mxu0
        %v612 = vadd.f32 %v508, %v611
        %v613 = vpop.f32.mrb[0].mxu0
        %v614 = vadd.f32 %v508, %v613
        %615 = vmatprep.mubr.bf16.mxu0 0
        %616 = vmatmul.mubr.bf16.gmra.mrb[0].mxu0 %v558
        %v617 = vpop.f32.mrb[0].mxu0
        %v618 = vadd.f32 %v513, %v617
        %v619 = vpop.f32.mrb[0].mxu0
        %v620 = vadd.f32 %v513, %v619
        %v621 = vpop.f32.mrb[0].mxu0
        %v622 = vadd.f32 %v518, %v621
        %v623 = vpop.f32.mrb[0].mxu0
        %v624 = vadd.f32 %v518, %v623
        %625 = vmatprep.mubr.bf16.mxu0 0
        %626 = vmatmul.mubr.bf16.gmra.mrb[0].mxu0 %v561
        %v627 = vpop.f32.mrb[0].mxu0
        %v628 = vadd.f32 %v523, %v627
        %v629 = vpop.f32.mrb[0].mxu0
        %v630 = vadd.f32 %v523, %v629
        %v631 = vpop.f32.mrb[0].mxu0
        %v632 = vadd.f32 %v528, %v631
        %v633 = vpop.f32.mrb[0].mxu0
        %v634 = vadd.f32 %v528, %v633
        %635 = vdwg.mxu0
        %v636 = vmax.f32 %v598, 0.0
        %v637 = vmax.f32 %v600, 0.0
        %v638 = vmax.f32 %v602, 0.0
        %v639 = vmax.f32 %v604, 0.0
        %v640 = vmax.f32 %v608, 0.0
        %v641 = vmax.f32 %v610, 0.0
        %v642 = vmax.f32 %v612, 0.0
        %v643 = vmax.f32 %v614, 0.0
        %v644 = vmax.f32 %v618, 0.0
        %v645 = vmax.f32 %v620, 0.0
        %v646 = vmax.f32 %v622, 0.0
        %v647 = vmax.f32 %v624, 0.0
        %v648 = vmax.f32 %v628, 0.0
        %v649 = vmax.f32 %v630, 0.0
        %v650 = vmax.f32 %v632, 0.0
        %v651 = vmax.f32 %v634, 0.0
        %v652 = vld [vmem:[%s5] sm:$0xf]
        %v653 = vld [vmem:[%s5 + $0x4] sm:$0xf]
        %v654 = vld [vmem:[%s5 + $0x8] sm:$0xf]
        %v655 = vld [vmem:[%s5 + $0xc] sm:$0xf]
        %v656 = vld [vmem:[%s5 + $0x10] sm:$0xf]
        %v657 = vld [vmem:[%s5 + $0x14] sm:$0xf]
        %v658 = vld [vmem:[%s5 + $0x18] sm:$0xf]
        %v659 = vld [vmem:[%s5 + $0x1c] sm:$0xf]
        %v660 = vld [vmem:[%s5 + $0x20] sm:$0xf]
        %v661 = vld [vmem:[%s5 + $0x24] sm:$0xf]
        %v662 = vld [vmem:[%s5 + $0x28] sm:$0xf]
        %v663 = vld [vmem:[%s5 + $0x2c] sm:$0xf]
        %v664 = vld [vmem:[%s5 + $0x30] sm:$0xf]
        %v665 = vld [vmem:[%s5 + $0x34] sm:$0xf]
        %v666 = vld [vmem:[%s5 + $0x38] sm:$0xf]
        %v667 = vld [vmem:[%s5 + $0x3c] sm:$0xf]
        %v668 = vpack.c.bf16 %v638, %v636
        %v669 = vpack.c.bf16 %v639, %v637
        %v670 = vpack.c.bf16 %v642, %v640
        %v671 = vpack.c.bf16 %v643, %v641
        %v672 = vpack.c.bf16 %v646, %v644
        %v673 = vpack.c.bf16 %v647, %v645
        %v674 = vpack.c.bf16 %v650, %v648
        %v675 = vpack.c.bf16 %v651, %v649
        %v676 = vld [vmem:[%s6] sm:$0xff]
        %v677 = vld [vmem:[%s6 + $0x8] sm:$0xff]
        %v678 = vld [vmem:[%s6 + $0x10] sm:$0xff]
        %v679 = vld [vmem:[%s6 + $0x18] sm:$0xff]
        %v680 = vld [vmem:[%s6 + $0x20] sm:$0xff]
        %v681 = vld [vmem:[%s6 + $0x28] sm:$0xff]
        %v682 = vld [vmem:[%s6 + $0x30] sm:$0xff]
        %v683 = vld [vmem:[%s6 + $0x38] sm:$0xff]
        %v684 = vld [vmem:[%s6 + $0x40] sm:$0xff]
        %v685 = vld [vmem:[%s6 + $0x48] sm:$0xff]
        %v686 = vld [vmem:[%s6 + $0x50] sm:$0xff]
        %v687 = vld [vmem:[%s6 + $0x58] sm:$0xff]
        %v688 = vld [vmem:[%s6 + $0x60] sm:$0xff]
        %v689 = vld [vmem:[%s6 + $0x68] sm:$0xff]
        %v690 = vld [vmem:[%s6 + $0x70] sm:$0xff]
        %v691 = vld [vmem:[%s6 + $0x78] sm:$0xff]
        %693 = vset.pattern.permute.xlu0 0
        %694 = vperm.xlu0 %693, %v676
        %v695 = vpop.permute.xlu0 %694
        %698 = vset.pattern.permute.xlu0 0
        %699 = vperm.xlu0 %698, %v677
        %v700 = vpop.permute.xlu0 %699
        %703 = vset.pattern.permute.xlu0 0
        %704 = vperm.xlu0 %703, %v678
        %v705 = vpop.permute.xlu0 %704
        %708 = vset.pattern.permute.xlu0 0
        %709 = vperm.xlu0 %708, %v679
        %v710 = vpop.permute.xlu0 %709
        %713 = vset.pattern.permute.xlu0 0
        %714 = vperm.xlu0 %713, %v680
        %v715 = vpop.permute.xlu0 %714
        %718 = vset.pattern.permute.xlu0 0
        %719 = vperm.xlu0 %718, %v681
        %v720 = vpop.permute.xlu0 %719
        %723 = vset.pattern.permute.xlu0 0
        %724 = vperm.xlu0 %723, %v682
        %v725 = vpop.permute.xlu0 %724
        %728 = vset.pattern.permute.xlu0 0
        %729 = vperm.xlu0 %728, %v683
        %v730 = vpop.permute.xlu0 %729
        %733 = vset.pattern.permute.xlu0 0
        %734 = vperm.xlu0 %733, %v684
        %v735 = vpop.permute.xlu0 %734
        %738 = vset.pattern.permute.xlu0 0
        %739 = vperm.xlu0 %738, %v685
        %v740 = vpop.permute.xlu0 %739
        %743 = vset.pattern.permute.xlu0 0
        %744 = vperm.xlu0 %743, %v686
        %v745 = vpop.permute.xlu0 %744
        %748 = vset.pattern.permute.xlu0 0
        %749 = vperm.xlu0 %748, %v687
        %v750 = vpop.permute.xlu0 %749
        %753 = vset.pattern.permute.xlu0 0
        %754 = vperm.xlu0 %753, %v688
        %v755 = vpop.permute.xlu0 %754
        %758 = vset.pattern.permute.xlu0 0
        %759 = vperm.xlu0 %758, %v689
        %v760 = vpop.permute.xlu0 %759
        %763 = vset.pattern.permute.xlu0 0
        %764 = vperm.xlu0 %763, %v690
        %v765 = vpop.permute.xlu0 %764
        %768 = vset.pattern.permute.xlu0 0
        %769 = vperm.xlu0 %768, %v691
        %v770 = vpop.permute.xlu0 %769
        %v788 = vunpack.c.l.b16 %v652
        %v789 = vunpack.c.l.b16 %v653
        %v790 = vunpack.c.l.b16 %v654
        %v791 = vunpack.c.l.b16 %v655
        %v792 = vunpack.c.l.b16 %v656
        %v793 = vunpack.c.l.b16 %v657
        %v794 = vunpack.c.l.b16 %v658
        %v795 = vunpack.c.l.b16 %v659
        %v796 = vunpack.c.l.b16 %v660
        %v797 = vunpack.c.l.b16 %v661
        %v798 = vunpack.c.l.b16 %v662
        %v799 = vunpack.c.l.b16 %v663
        %v800 = vunpack.c.l.b16 %v664
        %v801 = vunpack.c.l.b16 %v665
        %v802 = vunpack.c.l.b16 %v666
        %v803 = vunpack.c.l.b16 %v667
        %v804 = vpack.c.b16 %v789, %v788
        %v805 = vpack.c.b16 %v791, %v790
        %v806 = vpack.c.b16 %v793, %v792
        %v807 = vpack.c.b16 %v795, %v794
        %v808 = vpack.c.b16 %v797, %v796
        %v809 = vpack.c.b16 %v799, %v798
        %v810 = vpack.c.b16 %v801, %v800
        %v811 = vpack.c.b16 %v803, %v802
        %vm812 = vcmask 523264
        %v814 = vsel %vm812, %v804, 0
        %v817 = vsel %vm812, %v805, 0
        %v820 = vsel %vm812, %v806, 0
        %v823 = vsel %vm812, %v807, 0
        %v826 = vsel %vm812, %v808, 0
        %v829 = vsel %vm812, %v809, 0
        %v832 = vsel %vm812, %v810, 0
        %v835 = vsel %vm812, %v811, 0
        %837 = vmatprep.subr.bf16.mxu0 %v669
        %838 = vmatpush1.bf16.msra.mxu0 %v668
        %839 = vmatprep.subr.bf16.mxu0 %v671
        %840 = vmatpush1.bf16.msra.mxu0 %v670
        %841 = vmatprep.subr.bf16.mxu0 %v673
        %842 = vmatpush1.bf16.msra.mxu0 %v672
        %843 = vmatprep.subr.bf16.mxu0 %v675
        %844 = vmatpush1.bf16.msra.mxu0 %v674
        %845 = vmatprep.subr.bf16.mxu0 0
        %846 = vmatpush1.bf16.msra.mxu0 0
        %847 = vmatprep.subr.bf16.mxu0 0
        %848 = vmatpush1.bf16.msra.mxu0 0
        %849 = vmatprep.subr.bf16.mxu0 0
        %850 = vmatpush1.bf16.msra.mxu0 0
        %851 = vmatprep.subr.bf16.mxu0 0
        %852 = vmatpush1.bf16.msra.mxu0 0
        %853 = vmatprep.subr.bf16.mxu0 0
        %854 = vmatpush1.bf16.msra.mxu0 0
        %855 = vmatprep.subr.bf16.mxu0 0
        %856 = vmatpush1.bf16.msra.mxu0 0
        %857 = vmatprep.subr.bf16.mxu0 0
        %858 = vmatpush1.bf16.msra.mxu0 0
        %859 = vmatprep.subr.bf16.mxu0 0
        %860 = vmatpush1.bf16.msra.mxu0 0
        %861 = vmatprep.subr.bf16.mxu0 0
        %862 = vmatpush1.bf16.msra.mxu0 0
        %863 = vmatprep.subr.bf16.mxu0 0
        %864 = vmatpush1.bf16.msra.mxu0 0
        %865 = vmatprep.subr.bf16.mxu0 0
        %866 = vmatpush1.bf16.msra.mxu0 0
        %867 = vmatprep.subr.bf16.mxu0 0
        %868 = vmatpush1.bf16.msra.mxu0 0
        %869 = vmatprep.mubr.bf16.mxu0 0
        %870 = vmatmul.mubr.bf16.gmra.mrb[0].mxu0 %v814
        %v871 = vpop.f32.mrb[0].mxu0
        %v872 = vadd.f32 %v695, %v871
        %v873 = vpop.f32.mrb[0].mxu0
        %v874 = vadd.f32 %v695, %v873
        %v875 = vpop.f32.mrb[0].mxu0
        %v876 = vadd.f32 %v700, %v875
        %v877 = vpop.f32.mrb[0].mxu0
        %v878 = vadd.f32 %v700, %v877
        %879 = vmatprep.mubr.bf16.mxu0 0
        %880 = vmatmul.mubr.bf16.gmra.mrb[0].mxu0 %v817
        %v881 = vpop.f32.mrb[0].mxu0
        %v882 = vadd.f32 %v705, %v881
        %v883 = vpop.f32.mrb[0].mxu0
        %v884 = vadd.f32 %v705, %v883
        %v885 = vpop.f32.mrb[0].mxu0
        %v886 = vadd.f32 %v710, %v885
        %v887 = vpop.f32.mrb[0].mxu0
        %v888 = vadd.f32 %v710, %v887
        %889 = vmatprep.mubr.bf16.mxu0 0
        %890 = vmatmul.mubr.bf16.gmra.mrb[0].mxu0 %v820
        %v891 = vpop.f32.mrb[0].mxu0
        %v892 = vadd.f32 %v715, %v891
        %v893 = vpop.f32.mrb[0].mxu0
        %v894 = vadd.f32 %v715, %v893
        %v895 = vpop.f32.mrb[0].mxu0
        %v896 = vadd.f32 %v720, %v895
        %v897 = vpop.f32.mrb[0].mxu0
        %v898 = vadd.f32 %v720, %v897
        %899 = vmatprep.mubr.bf16.mxu0 0
        %900 = vmatmul.mubr.bf16.gmra.mrb[0].mxu0 %v823
        %v901 = vpop.f32.mrb[0].mxu0
        %v902 = vadd.f32 %v725, %v901
        %v903 = vpop.f32.mrb[0].mxu0
        %v904 = vadd.f32 %v725, %v903
        %v905 = vpop.f32.mrb[0].mxu0
        %v906 = vadd.f32 %v730, %v905
        %v907 = vpop.f32.mrb[0].mxu0
        %v908 = vadd.f32 %v730, %v907
        %909 = vmatprep.mubr.bf16.mxu0 0
        %910 = vmatmul.mubr.bf16.gmra.mrb[0].mxu0 %v826
        %v911 = vpop.f32.mrb[0].mxu0
        %v912 = vadd.f32 %v735, %v911
        %v913 = vpop.f32.mrb[0].mxu0
        %v914 = vadd.f32 %v735, %v913
        %v915 = vpop.f32.mrb[0].mxu0
        %v916 = vadd.f32 %v740, %v915
        %v917 = vpop.f32.mrb[0].mxu0
        %v918 = vadd.f32 %v740, %v917
        %919 = vmatprep.mubr.bf16.mxu0 0
        %920 = vmatmul.mubr.bf16.gmra.mrb[0].mxu0 %v829
        %v921 = vpop.f32.mrb[0].mxu0
        %v922 = vadd.f32 %v745, %v921
        %v923 = vpop.f32.mrb[0].mxu0
        %v924 = vadd.f32 %v745, %v923
        %v925 = vpop.f32.mrb[0].mxu0
        %v926 = vadd.f32 %v750, %v925
        %v927 = vpop.f32.mrb[0].mxu0
        %v928 = vadd.f32 %v750, %v927
        %929 = vmatprep.mubr.bf16.mxu0 0
        %930 = vmatmul.mubr.bf16.gmra.mrb[0].mxu0 %v832
        %v931 = vpop.f32.mrb[0].mxu0
        %v932 = vadd.f32 %v755, %v931
        %v933 = vpop.f32.mrb[0].mxu0
        %v934 = vadd.f32 %v755, %v933
        %v935 = vpop.f32.mrb[0].mxu0
        %v936 = vadd.f32 %v760, %v935
        %v937 = vpop.f32.mrb[0].mxu0
        %v938 = vadd.f32 %v760, %v937
        %939 = vmatprep.mubr.bf16.mxu0 0
        %940 = vmatmul.mubr.bf16.gmra.mrb[0].mxu0 %v835
        %v941 = vpop.f32.mrb[0].mxu0
        %v942 = vadd.f32 %v765, %v941
        %v943 = vpop.f32.mrb[0].mxu0
        %v944 = vadd.f32 %v765, %v943
        %v945 = vpop.f32.mrb[0].mxu0
        %v946 = vadd.f32 %v770, %v945
        %v947 = vpop.f32.mrb[0].mxu0
        %v948 = vadd.f32 %v770, %v947
        %949 = vdwg.mxu0
        %v950 = vmax.f32 %v872, 0.0
        %v951 = vmax.f32 %v874, 0.0
        %v952 = vmax.f32 %v876, 0.0
        %v953 = vmax.f32 %v878, 0.0
        %v954 = vmax.f32 %v882, 0.0
        %v955 = vmax.f32 %v884, 0.0
        %v956 = vmax.f32 %v886, 0.0
        %v957 = vmax.f32 %v888, 0.0
        %v958 = vmax.f32 %v892, 0.0
        %v959 = vmax.f32 %v894, 0.0
        %v960 = vmax.f32 %v896, 0.0
        %v961 = vmax.f32 %v898, 0.0
        %v962 = vmax.f32 %v902, 0.0
        %v963 = vmax.f32 %v904, 0.0
        %v964 = vmax.f32 %v906, 0.0
        %v965 = vmax.f32 %v908, 0.0
        %v966 = vmax.f32 %v912, 0.0
        %v967 = vmax.f32 %v914, 0.0
        %v968 = vmax.f32 %v916, 0.0
        %v969 = vmax.f32 %v918, 0.0
        %v970 = vmax.f32 %v922, 0.0
        %v971 = vmax.f32 %v924, 0.0
        %v972 = vmax.f32 %v926, 0.0
        %v973 = vmax.f32 %v928, 0.0
        %v974 = vmax.f32 %v932, 0.0
        %v975 = vmax.f32 %v934, 0.0
        %v976 = vmax.f32 %v936, 0.0
        %v977 = vmax.f32 %v938, 0.0
        %v978 = vmax.f32 %v942, 0.0
        %v979 = vmax.f32 %v944, 0.0
        %v980 = vmax.f32 %v946, 0.0
        %v981 = vmax.f32 %v948, 0.0
        %v982 = vld [vmem:[%s7] sm:$0xf]
        %v983 = vld [vmem:[%s7 + $0x4] sm:$0xf]
        %v984 = vld [vmem:[%s7 + $0x8] sm:$0xf]
        %v985 = vld [vmem:[%s7 + $0xc] sm:$0xf]
        %v986 = vld [vmem:[%s7 + $0x10] sm:$0xf]
        %v987 = vld [vmem:[%s7 + $0x14] sm:$0xf]
        %v988 = vld [vmem:[%s7 + $0x18] sm:$0xf]
        %v989 = vld [vmem:[%s7 + $0x1c] sm:$0xf]
        %v990 = vld [vmem:[%s7 + $0x20] sm:$0xf]
        %v991 = vld [vmem:[%s7 + $0x24] sm:$0xf]
        %v992 = vld [vmem:[%s7 + $0x28] sm:$0xf]
        %v993 = vld [vmem:[%s7 + $0x2c] sm:$0xf]
        %v994 = vld [vmem:[%s7 + $0x30] sm:$0xf]
        %v995 = vld [vmem:[%s7 + $0x34] sm:$0xf]
        %v996 = vld [vmem:[%s7 + $0x38] sm:$0xf]
        %v997 = vld [vmem:[%s7 + $0x3c] sm:$0xf]
        %v998 = vld [vmem:[%s7 + $0x40] sm:$0xf]
        %v999 = vld [vmem:[%s7 + $0x44] sm:$0xf]
        %v1000 = vld [vmem:[%s7 + $0x48] sm:$0xf]
        %v1001 = vld [vmem:[%s7 + $0x4c] sm:$0xf]
        %v1002 = vld [vmem:[%s7 + $0x50] sm:$0xf]
        %v1003 = vld [vmem:[%s7 + $0x54] sm:$0xf]
        %v1004 = vld [vmem:[%s7 + $0x58] sm:$0xf]
        %v1005 = vld [vmem:[%s7 + $0x5c] sm:$0xf]
        %v1006 = vld [vmem:[%s7 + $0x60] sm:$0xf]
        %v1007 = vld [vmem:[%s7 + $0x64] sm:$0xf]
        %v1008 = vld [vmem:[%s7 + $0x68] sm:$0xf]
        %v1009 = vld [vmem:[%s7 + $0x6c] sm:$0xf]
        %v1010 = vld [vmem:[%s7 + $0x70] sm:$0xf]
        %v1011 = vld [vmem:[%s7 + $0x74] sm:$0xf]
        %v1012 = vld [vmem:[%s7 + $0x78] sm:$0xf]
        %v1013 = vld [vmem:[%s7 + $0x7c] sm:$0xf]
        %v1014 = vpack.c.bf16 %v952, %v950
        %v1015 = vpack.c.bf16 %v953, %v951
        %v1016 = vpack.c.bf16 %v956, %v954
        %v1017 = vpack.c.bf16 %v957, %v955
        %v1018 = vpack.c.bf16 %v960, %v958
        %v1019 = vpack.c.bf16 %v961, %v959
        %v1020 = vpack.c.bf16 %v964, %v962
        %v1021 = vpack.c.bf16 %v965, %v963
        %v1022 = vpack.c.bf16 %v968, %v966
        %v1023 = vpack.c.bf16 %v969, %v967
        %v1024 = vpack.c.bf16 %v972, %v970
        %v1025 = vpack.c.bf16 %v973, %v971
        %v1026 = vpack.c.bf16 %v976, %v974
        %v1027 = vpack.c.bf16 %v977, %v975
        %v1028 = vpack.c.bf16 %v980, %v978
        %v1029 = vpack.c.bf16 %v981, %v979
        %v1030 = vld [vmem:[%s8] sm:$0xff]
        %v1031 = vld [vmem:[%s8 + $0x8] sm:$0xff]
        %v1032 = vld [vmem:[%s8 + $0x10] sm:$0xff]
        %v1033 = vld [vmem:[%s8 + $0x18] sm:$0xff]
        %v1034 = vld [vmem:[%s8 + $0x20] sm:$0xff]
        %v1035 = vld [vmem:[%s8 + $0x28] sm:$0xff]
        %v1036 = vld [vmem:[%s8 + $0x30] sm:$0xff]
        %v1037 = vld [vmem:[%s8 + $0x38] sm:$0xff]
        %v1038 = vld [vmem:[%s8 + $0x40] sm:$0xff]
        %v1039 = vld [vmem:[%s8 + $0x48] sm:$0xff]
        %v1040 = vld [vmem:[%s8 + $0x50] sm:$0xff]
        %v1041 = vld [vmem:[%s8 + $0x58] sm:$0xff]
        %v1042 = vld [vmem:[%s8 + $0x60] sm:$0xff]
        %v1043 = vld [vmem:[%s8 + $0x68] sm:$0xff]
        %v1044 = vld [vmem:[%s8 + $0x70] sm:$0xff]
        %v1045 = vld [vmem:[%s8 + $0x78] sm:$0xff]
        %v1046 = vld [vmem:[%s8 + $0x80] sm:$0xff]
        %v1047 = vld [vmem:[%s8 + $0x88] sm:$0xff]
        %v1048 = vld [vmem:[%s8 + $0x90] sm:$0xff]
        %v1049 = vld [vmem:[%s8 + $0x98] sm:$0xff]
        %v1050 = vld [vmem:[%s8 + $0xa0] sm:$0xff]
        %v1051 = vld [vmem:[%s8 + $0xa8] sm:$0xff]
        %v1052 = vld [vmem:[%s8 + $0xb0] sm:$0xff]
        %v1053 = vld [vmem:[%s8 + $0xb8] sm:$0xff]
        %v1054 = vld [vmem:[%s8 + $0xc0] sm:$0xff]
        %v1055 = vld [vmem:[%s8 + $0xc8] sm:$0xff]
        %v1056 = vld [vmem:[%s8 + $0xd0] sm:$0xff]
        %v1057 = vld [vmem:[%s8 + $0xd8] sm:$0xff]
        %v1058 = vld [vmem:[%s8 + $0xe0] sm:$0xff]
        %v1059 = vld [vmem:[%s8 + $0xe8] sm:$0xff]
        %v1060 = vld [vmem:[%s8 + $0xf0] sm:$0xff]
        %v1061 = vld [vmem:[%s8 + $0xf8] sm:$0xff]
        %1063 = vset.pattern.permute.xlu0 0
        %1064 = vperm.xlu0 %1063, %v1030
        %v1065 = vpop.permute.xlu0 %1064
        %1068 = vset.pattern.permute.xlu0 0
        %1069 = vperm.xlu0 %1068, %v1031
        %v1070 = vpop.permute.xlu0 %1069
        %1073 = vset.pattern.permute.xlu0 0
        %1074 = vperm.xlu0 %1073, %v1032
        %v1075 = vpop.permute.xlu0 %1074
        %1078 = vset.pattern.permute.xlu0 0
        %1079 = vperm.xlu0 %1078, %v1033
        %v1080 = vpop.permute.xlu0 %1079
        %1083 = vset.pattern.permute.xlu0 0
        %1084 = vperm.xlu0 %1083, %v1034
        %v1085 = vpop.permute.xlu0 %1084
        %1088 = vset.pattern.permute.xlu0 0
        %1089 = vperm.xlu0 %1088, %v1035
        %v1090 = vpop.permute.xlu0 %1089
        %1093 = vset.pattern.permute.xlu0 0
        %1094 = vperm.xlu0 %1093, %v1036
        %v1095 = vpop.permute.xlu0 %1094
        %1098 = vset.pattern.permute.xlu0 0
        %1099 = vperm.xlu0 %1098, %v1037
        %v1100 = vpop.permute.xlu0 %1099
        %1103 = vset.pattern.permute.xlu0 0
        %1104 = vperm.xlu0 %1103, %v1038
        %v1105 = vpop.permute.xlu0 %1104
        %1108 = vset.pattern.permute.xlu0 0
        %1109 = vperm.xlu0 %1108, %v1039
        %v1110 = vpop.permute.xlu0 %1109
        %1113 = vset.pattern.permute.xlu0 0
        %1114 = vperm.xlu0 %1113, %v1040
        %v1115 = vpop.permute.xlu0 %1114
        %1118 = vset.pattern.permute.xlu0 0
        %1119 = vperm.xlu0 %1118, %v1041
        %v1120 = vpop.permute.xlu0 %1119
        %1123 = vset.pattern.permute.xlu0 0
        %1124 = vperm.xlu0 %1123, %v1042
        %v1125 = vpop.permute.xlu0 %1124
        %1128 = vset.pattern.permute.xlu0 0
        %1129 = vperm.xlu0 %1128, %v1043
        %v1130 = vpop.permute.xlu0 %1129
        %1133 = vset.pattern.permute.xlu0 0
        %1134 = vperm.xlu0 %1133, %v1044
        %v1135 = vpop.permute.xlu0 %1134
        %1138 = vset.pattern.permute.xlu0 0
        %1139 = vperm.xlu0 %1138, %v1045
        %v1140 = vpop.permute.xlu0 %1139
        %1143 = vset.pattern.permute.xlu0 0
        %1144 = vperm.xlu0 %1143, %v1046
        %v1145 = vpop.permute.xlu0 %1144
        %1148 = vset.pattern.permute.xlu0 0
        %1149 = vperm.xlu0 %1148, %v1047
        %v1150 = vpop.permute.xlu0 %1149
        %1153 = vset.pattern.permute.xlu0 0
        %1154 = vperm.xlu0 %1153, %v1048
        %v1155 = vpop.permute.xlu0 %1154
        %1158 = vset.pattern.permute.xlu0 0
        %1159 = vperm.xlu0 %1158, %v1049
        %v1160 = vpop.permute.xlu0 %1159
        %1163 = vset.pattern.permute.xlu0 0
        %1164 = vperm.xlu0 %1163, %v1050
        %v1165 = vpop.permute.xlu0 %1164
        %1168 = vset.pattern.permute.xlu0 0
        %1169 = vperm.xlu0 %1168, %v1051
        %v1170 = vpop.permute.xlu0 %1169
        %1173 = vset.pattern.permute.xlu0 0
        %1174 = vperm.xlu0 %1173, %v1052
        %v1175 = vpop.permute.xlu0 %1174
        %1178 = vset.pattern.permute.xlu0 0
        %1179 = vperm.xlu0 %1178, %v1053
        %v1180 = vpop.permute.xlu0 %1179
        %1183 = vset.pattern.permute.xlu0 0
        %1184 = vperm.xlu0 %1183, %v1054
        %v1185 = vpop.permute.xlu0 %1184
        %1188 = vset.pattern.permute.xlu0 0
        %1189 = vperm.xlu0 %1188, %v1055
        %v1190 = vpop.permute.xlu0 %1189
        %1193 = vset.pattern.permute.xlu0 0
        %1194 = vperm.xlu0 %1193, %v1056
        %v1195 = vpop.permute.xlu0 %1194
        %1198 = vset.pattern.permute.xlu0 0
        %1199 = vperm.xlu0 %1198, %v1057
        %v1200 = vpop.permute.xlu0 %1199
        %1203 = vset.pattern.permute.xlu0 0
        %1204 = vperm.xlu0 %1203, %v1058
        %v1205 = vpop.permute.xlu0 %1204
        %1208 = vset.pattern.permute.xlu0 0
        %1209 = vperm.xlu0 %1208, %v1059
        %v1210 = vpop.permute.xlu0 %1209
        %1213 = vset.pattern.permute.xlu0 0
        %1214 = vperm.xlu0 %1213, %v1060
        %v1215 = vpop.permute.xlu0 %1214
        %1218 = vset.pattern.permute.xlu0 0
        %1219 = vperm.xlu0 %1218, %v1061
        %v1220 = vpop.permute.xlu0 %1219
        %v1254 = vunpack.c.l.b16 %v982
        %v1255 = vunpack.c.l.b16 %v983
        %v1256 = vunpack.c.l.b16 %v984
        %v1257 = vunpack.c.l.b16 %v985
        %v1258 = vunpack.c.l.b16 %v986
        %v1259 = vunpack.c.l.b16 %v987
        %v1260 = vunpack.c.l.b16 %v988
        %v1261 = vunpack.c.l.b16 %v989
        %v1262 = vunpack.c.l.b16 %v990
        %v1263 = vunpack.c.l.b16 %v991
        %v1264 = vunpack.c.l.b16 %v992
        %v1265 = vunpack.c.l.b16 %v993
        %v1266 = vunpack.c.l.b16 %v994
        %v1267 = vunpack.c.l.b16 %v995
        %v1268 = vunpack.c.l.b16 %v996
        %v1269 = vunpack.c.l.b16 %v997
        %v1270 = vunpack.c.l.b16 %v998
        %v1271 = vunpack.c.l.b16 %v999
        %v1272 = vunpack.c.l.b16 %v1000
        %v1273 = vunpack.c.l.b16 %v1001
        %v1274 = vunpack.c.l.b16 %v1002
        %v1275 = vunpack.c.l.b16 %v1003
        %v1276 = vunpack.c.l.b16 %v1004
        %v1277 = vunpack.c.l.b16 %v1005
        %v1278 = vunpack.c.l.b16 %v1006
        %v1279 = vunpack.c.l.b16 %v1007
        %v1280 = vunpack.c.l.b16 %v1008
        %v1281 = vunpack.c.l.b16 %v1009
        %v1282 = vunpack.c.l.b16 %v1010
        %v1283 = vunpack.c.l.b16 %v1011
        %v1284 = vunpack.c.l.b16 %v1012
        %v1285 = vunpack.c.l.b16 %v1013
        %v1286 = vpack.c.b16 %v1255, %v1254
        %v1287 = vpack.c.b16 %v1257, %v1256
        %v1288 = vpack.c.b16 %v1259, %v1258
        %v1289 = vpack.c.b16 %v1261, %v1260
        %v1290 = vpack.c.b16 %v1263, %v1262
        %v1291 = vpack.c.b16 %v1265, %v1264
        %v1292 = vpack.c.b16 %v1267, %v1266
        %v1293 = vpack.c.b16 %v1269, %v1268
        %v1294 = vpack.c.b16 %v1271, %v1270
        %v1295 = vpack.c.b16 %v1273, %v1272
        %v1296 = vpack.c.b16 %v1275, %v1274
        %v1297 = vpack.c.b16 %v1277, %v1276
        %v1298 = vpack.c.b16 %v1279, %v1278
        %v1299 = vpack.c.b16 %v1281, %v1280
        %v1300 = vpack.c.b16 %v1283, %v1282
        %v1301 = vpack.c.b16 %v1285, %v1284
        %1318 = vmatprep.subr.bf16.mxu0 %v1015
        %1319 = vmatpush1.bf16.msra.mxu0 %v1014
        %1320 = vmatprep.subr.bf16.mxu0 %v1017
        %1321 = vmatpush1.bf16.msra.mxu0 %v1016
        %1322 = vmatprep.subr.bf16.mxu0 %v1019
        %1323 = vmatpush1.bf16.msra.mxu0 %v1018
        %1324 = vmatprep.subr.bf16.mxu0 %v1021
        %1325 = vmatpush1.bf16.msra.mxu0 %v1020
        %1326 = vmatprep.subr.bf16.mxu0 %v1023
        %1327 = vmatpush1.bf16.msra.mxu0 %v1022
        %1328 = vmatprep.subr.bf16.mxu0 %v1025
        %1329 = vmatpush1.bf16.msra.mxu0 %v1024
        %1330 = vmatprep.subr.bf16.mxu0 %v1027
        %1331 = vmatpush1.bf16.msra.mxu0 %v1026
        %1332 = vmatprep.subr.bf16.mxu0 %v1029
        %1333 = vmatpush1.bf16.msra.mxu0 %v1028
        %1334 = vmatprep.subr.bf16.mxu0 0
        %1335 = vmatpush1.bf16.msra.mxu0 0
        %1336 = vmatprep.subr.bf16.mxu0 0
        %1337 = vmatpush1.bf16.msra.mxu0 0
        %1338 = vmatprep.subr.bf16.mxu0 0
        %1339 = vmatpush1.bf16.msra.mxu0 0
        %1340 = vmatprep.subr.bf16.mxu0 0
        %1341 = vmatpush1.bf16.msra.mxu0 0
        %1342 = vmatprep.subr.bf16.mxu0 0
        %1343 = vmatpush1.bf16.msra.mxu0 0
        %1344 = vmatprep.subr.bf16.mxu0 0
        %1345 = vmatpush1.bf16.msra.mxu0 0
        %1346 = vmatprep.subr.bf16.mxu0 0
        %1347 = vmatpush1.bf16.msra.mxu0 0
        %1348 = vmatprep.subr.bf16.mxu0 0
        %1349 = vmatpush1.bf16.msra.mxu0 0
        %1350 = vmatprep.mubr.bf16.mxu0 0
        %1351 = vmatmul.mubr.bf16.gmra.mrb[0].mxu0 %v1286
        %v1352 = vpop.f32.mrb[0].mxu0
        %v1353 = vadd.f32 %v1065, %v1352
        %v1354 = vpop.f32.mrb[0].mxu0
        %v1355 = vadd.f32 %v1065, %v1354
        %v1356 = vpop.f32.mrb[0].mxu0
        %v1357 = vadd.f32 %v1070, %v1356
        %v1358 = vpop.f32.mrb[0].mxu0
        %v1359 = vadd.f32 %v1070, %v1358
        %1360 = vmatprep.mubr.bf16.mxu0 0
        %1361 = vmatmul.mubr.bf16.gmra.mrb[0].mxu0 %v1287
        %v1362 = vpop.f32.mrb[0].mxu0
        %v1363 = vadd.f32 %v1075, %v1362
        %v1364 = vpop.f32.mrb[0].mxu0
        %v1365 = vadd.f32 %v1075, %v1364
        %v1366 = vpop.f32.mrb[0].mxu0
        %v1367 = vadd.f32 %v1080, %v1366
        %v1368 = vpop.f32.mrb[0].mxu0
        %v1369 = vadd.f32 %v1080, %v1368
        %1370 = vmatprep.mubr.bf16.mxu0 0
        %1371 = vmatmul.mubr.bf16.gmra.mrb[0].mxu0 %v1288
        %v1372 = vpop.f32.mrb[0].mxu0
        %v1373 = vadd.f32 %v1085, %v1372
        %v1374 = vpop.f32.mrb[0].mxu0
        %v1375 = vadd.f32 %v1085, %v1374
        %v1376 = vpop.f32.mrb[0].mxu0
        %v1377 = vadd.f32 %v1090, %v1376
        %v1378 = vpop.f32.mrb[0].mxu0
        %v1379 = vadd.f32 %v1090, %v1378
        %1380 = vmatprep.mubr.bf16.mxu0 0
        %1381 = vmatmul.mubr.bf16.gmra.mrb[0].mxu0 %v1289
        %v1382 = vpop.f32.mrb[0].mxu0
        %v1383 = vadd.f32 %v1095, %v1382
        %v1384 = vpop.f32.mrb[0].mxu0
        %v1385 = vadd.f32 %v1095, %v1384
        %v1386 = vpop.f32.mrb[0].mxu0
        %v1387 = vadd.f32 %v1100, %v1386
        %v1388 = vpop.f32.mrb[0].mxu0
        %v1389 = vadd.f32 %v1100, %v1388
        %1390 = vmatprep.mubr.bf16.mxu0 0
        %1391 = vmatmul.mubr.bf16.gmra.mrb[0].mxu0 %v1290
        %v1392 = vpop.f32.mrb[0].mxu0
        %v1393 = vadd.f32 %v1105, %v1392
        %v1394 = vpop.f32.mrb[0].mxu0
        %v1395 = vadd.f32 %v1105, %v1394
        %v1396 = vpop.f32.mrb[0].mxu0
        %v1397 = vadd.f32 %v1110, %v1396
        %v1398 = vpop.f32.mrb[0].mxu0
        %v1399 = vadd.f32 %v1110, %v1398
        %1400 = vmatprep.mubr.bf16.mxu0 0
        %1401 = vmatmul.mubr.bf16.gmra.mrb[0].mxu0 %v1291
        %v1402 = vpop.f32.mrb[0].mxu0
        %v1403 = vadd.f32 %v1115, %v1402
        %v1404 = vpop.f32.mrb[0].mxu0
        %v1405 = vadd.f32 %v1115, %v1404
        %v1406 = vpop.f32.mrb[0].mxu0
        %v1407 = vadd.f32 %v1120, %v1406
        %v1408 = vpop.f32.mrb[0].mxu0
        %v1409 = vadd.f32 %v1120, %v1408
        %1410 = vmatprep.mubr.bf16.mxu0 0
        %1411 = vmatmul.mubr.bf16.gmra.mrb[0].mxu0 %v1292
        %v1412 = vpop.f32.mrb[0].mxu0
        %v1413 = vadd.f32 %v1125, %v1412
        %v1414 = vpop.f32.mrb[0].mxu0
        %v1415 = vadd.f32 %v1125, %v1414
        %v1416 = vpop.f32.mrb[0].mxu0
        %v1417 = vadd.f32 %v1130, %v1416
        %v1418 = vpop.f32.mrb[0].mxu0
        %v1419 = vadd.f32 %v1130, %v1418
        %1420 = vmatprep.mubr.bf16.mxu0 0
        %1421 = vmatmul.mubr.bf16.gmra.mrb[0].mxu0 %v1293
        %v1422 = vpop.f32.mrb[0].mxu0
        %v1423 = vadd.f32 %v1135, %v1422
        %v1424 = vpop.f32.mrb[0].mxu0
        %v1425 = vadd.f32 %v1135, %v1424
        %v1426 = vpop.f32.mrb[0].mxu0
        %v1427 = vadd.f32 %v1140, %v1426
        %v1428 = vpop.f32.mrb[0].mxu0
        %v1429 = vadd.f32 %v1140, %v1428
        %1430 = vmatprep.mubr.bf16.mxu0 0
        %1431 = vmatmul.mubr.bf16.gmra.mrb[0].mxu0 %v1294
        %v1432 = vpop.f32.mrb[0].mxu0
        %v1433 = vadd.f32 %v1145, %v1432
        %v1434 = vpop.f32.mrb[0].mxu0
        %v1435 = vadd.f32 %v1145, %v1434
        %v1436 = vpop.f32.mrb[0].mxu0
        %v1437 = vadd.f32 %v1150, %v1436
        %v1438 = vpop.f32.mrb[0].mxu0
        %v1439 = vadd.f32 %v1150, %v1438
        %1440 = vmatprep.mubr.bf16.mxu0 0
        %1441 = vmatmul.mubr.bf16.gmra.mrb[0].mxu0 %v1295
        %v1442 = vpop.f32.mrb[0].mxu0
        %v1443 = vadd.f32 %v1155, %v1442
        %v1444 = vpop.f32.mrb[0].mxu0
        %v1445 = vadd.f32 %v1155, %v1444
        %v1446 = vpop.f32.mrb[0].mxu0
        %v1447 = vadd.f32 %v1160, %v1446
        %v1448 = vpop.f32.mrb[0].mxu0
        %v1449 = vadd.f32 %v1160, %v1448
        %1450 = vmatprep.mubr.bf16.mxu0 0
        %1451 = vmatmul.mubr.bf16.gmra.mrb[0].mxu0 %v1296
        %v1452 = vpop.f32.mrb[0].mxu0
        %v1453 = vadd.f32 %v1165, %v1452
        %v1454 = vpop.f32.mrb[0].mxu0
        %v1455 = vadd.f32 %v1165, %v1454
        %v1456 = vpop.f32.mrb[0].mxu0
        %v1457 = vadd.f32 %v1170, %v1456
        %v1458 = vpop.f32.mrb[0].mxu0
        %v1459 = vadd.f32 %v1170, %v1458
        %1460 = vmatprep.mubr.bf16.mxu0 0
        %1461 = vmatmul.mubr.bf16.gmra.mrb[0].mxu0 %v1297
        %v1462 = vpop.f32.mrb[0].mxu0
        %v1463 = vadd.f32 %v1175, %v1462
        %v1464 = vpop.f32.mrb[0].mxu0
        %v1465 = vadd.f32 %v1175, %v1464
        %v1466 = vpop.f32.mrb[0].mxu0
        %v1467 = vadd.f32 %v1180, %v1466
        %v1468 = vpop.f32.mrb[0].mxu0
        %v1469 = vadd.f32 %v1180, %v1468
        %1470 = vmatprep.mubr.bf16.mxu0 0
        %1471 = vmatmul.mubr.bf16.gmra.mrb[0].mxu0 %v1298
        %v1472 = vpop.f32.mrb[0].mxu0
        %v1473 = vadd.f32 %v1185, %v1472
        %v1474 = vpop.f32.mrb[0].mxu0
        %v1475 = vadd.f32 %v1185, %v1474
        %v1476 = vpop.f32.mrb[0].mxu0
        %v1477 = vadd.f32 %v1190, %v1476
        %v1478 = vpop.f32.mrb[0].mxu0
        %v1479 = vadd.f32 %v1190, %v1478
        %1480 = vmatprep.mubr.bf16.mxu0 0
        %1481 = vmatmul.mubr.bf16.gmra.mrb[0].mxu0 %v1299
        %v1482 = vpop.f32.mrb[0].mxu0
        %v1483 = vadd.f32 %v1195, %v1482
        %v1484 = vpop.f32.mrb[0].mxu0
        %v1485 = vadd.f32 %v1195, %v1484
        %v1486 = vpop.f32.mrb[0].mxu0
        %v1487 = vadd.f32 %v1200, %v1486
        %v1488 = vpop.f32.mrb[0].mxu0
        %v1489 = vadd.f32 %v1200, %v1488
        %1490 = vmatprep.mubr.bf16.mxu0 0
        %1491 = vmatmul.mubr.bf16.gmra.mrb[0].mxu0 %v1300
        %v1492 = vpop.f32.mrb[0].mxu0
        %v1493 = vadd.f32 %v1205, %v1492
        %v1494 = vpop.f32.mrb[0].mxu0
        %v1495 = vadd.f32 %v1205, %v1494
        %v1496 = vpop.f32.mrb[0].mxu0
        %v1497 = vadd.f32 %v1210, %v1496
        %v1498 = vpop.f32.mrb[0].mxu0
        %v1499 = vadd.f32 %v1210, %v1498
        %1500 = vmatprep.mubr.bf16.mxu0 0
        %1501 = vmatmul.mubr.bf16.gmra.mrb[0].mxu0 %v1301
        %v1502 = vpop.f32.mrb[0].mxu0
        %v1503 = vadd.f32 %v1215, %v1502
        %v1504 = vpop.f32.mrb[0].mxu0
        %v1505 = vadd.f32 %v1215, %v1504
        %v1506 = vpop.f32.mrb[0].mxu0
        %v1507 = vadd.f32 %v1220, %v1506
        %v1508 = vpop.f32.mrb[0].mxu0
        %v1509 = vadd.f32 %v1220, %v1508
        %1510 = vdwg.mxu0
        %v1511 = vmax.f32 %v1353, 0.0
        %v1512 = vmax.f32 %v1355, 0.0
        %v1513 = vmax.f32 %v1357, 0.0
        %v1514 = vmax.f32 %v1359, 0.0
        %v1515 = vmax.f32 %v1363, 0.0
        %v1516 = vmax.f32 %v1365, 0.0
        %v1517 = vmax.f32 %v1367, 0.0
        %v1518 = vmax.f32 %v1369, 0.0
        %v1519 = vmax.f32 %v1373, 0.0
        %v1520 = vmax.f32 %v1375, 0.0
        %v1521 = vmax.f32 %v1377, 0.0
        %v1522 = vmax.f32 %v1379, 0.0
        %v1523 = vmax.f32 %v1383, 0.0
        %v1524 = vmax.f32 %v1385, 0.0
        %v1525 = vmax.f32 %v1387, 0.0
        %v1526 = vmax.f32 %v1389, 0.0
        %v1527 = vmax.f32 %v1393, 0.0
        %v1528 = vmax.f32 %v1395, 0.0
        %v1529 = vmax.f32 %v1397, 0.0
        %v1530 = vmax.f32 %v1399, 0.0
        %v1531 = vmax.f32 %v1403, 0.0
        %v1532 = vmax.f32 %v1405, 0.0
        %v1533 = vmax.f32 %v1407, 0.0
        %v1534 = vmax.f32 %v1409, 0.0
        %v1535 = vmax.f32 %v1413, 0.0
        %v1536 = vmax.f32 %v1415, 0.0
        %v1537 = vmax.f32 %v1417, 0.0
        %v1538 = vmax.f32 %v1419, 0.0
        %v1539 = vmax.f32 %v1423, 0.0
        %v1540 = vmax.f32 %v1425, 0.0
        %v1541 = vmax.f32 %v1427, 0.0
        %v1542 = vmax.f32 %v1429, 0.0
        %v1543 = vmax.f32 %v1433, 0.0
        %v1544 = vmax.f32 %v1435, 0.0
        %v1545 = vmax.f32 %v1437, 0.0
        %v1546 = vmax.f32 %v1439, 0.0
        %v1547 = vmax.f32 %v1443, 0.0
        %v1548 = vmax.f32 %v1445, 0.0
        %v1549 = vmax.f32 %v1447, 0.0
        %v1550 = vmax.f32 %v1449, 0.0
        %v1551 = vmax.f32 %v1453, 0.0
        %v1552 = vmax.f32 %v1455, 0.0
        %v1553 = vmax.f32 %v1457, 0.0
        %v1554 = vmax.f32 %v1459, 0.0
        %v1555 = vmax.f32 %v1463, 0.0
        %v1556 = vmax.f32 %v1465, 0.0
        %v1557 = vmax.f32 %v1467, 0.0
        %v1558 = vmax.f32 %v1469, 0.0
        %v1559 = vmax.f32 %v1473, 0.0
        %v1560 = vmax.f32 %v1475, 0.0
        %v1561 = vmax.f32 %v1477, 0.0
        %v1562 = vmax.f32 %v1479, 0.0
        %v1563 = vmax.f32 %v1483, 0.0
        %v1564 = vmax.f32 %v1485, 0.0
        %v1565 = vmax.f32 %v1487, 0.0
        %v1566 = vmax.f32 %v1489, 0.0
        %v1567 = vmax.f32 %v1493, 0.0
        %v1568 = vmax.f32 %v1495, 0.0
        %v1569 = vmax.f32 %v1497, 0.0
        %v1570 = vmax.f32 %v1499, 0.0
        %v1571 = vmax.f32 %v1503, 0.0
        %v1572 = vmax.f32 %v1505, 0.0
        %v1573 = vmax.f32 %v1507, 0.0
        %v1574 = vmax.f32 %v1509, 0.0
        %v1575 = vld [vmem:[%s9] sm:$0x3]
        %v1576 = vpack.c.bf16 %v1513, %v1511
        %v1577 = vpack.c.bf16 %v1514, %v1512
        %v1578 = vpack.c.bf16 %v1517, %v1515
        %v1579 = vpack.c.bf16 %v1518, %v1516
        %v1580 = vpack.c.bf16 %v1521, %v1519
        %v1581 = vpack.c.bf16 %v1522, %v1520
        %v1582 = vpack.c.bf16 %v1525, %v1523
        %v1583 = vpack.c.bf16 %v1526, %v1524
        %v1584 = vpack.c.bf16 %v1529, %v1527
        %v1585 = vpack.c.bf16 %v1530, %v1528
        %v1586 = vpack.c.bf16 %v1533, %v1531
        %v1587 = vpack.c.bf16 %v1534, %v1532
        %v1588 = vpack.c.bf16 %v1537, %v1535
        %v1589 = vpack.c.bf16 %v1538, %v1536
        %v1590 = vpack.c.bf16 %v1541, %v1539
        %v1591 = vpack.c.bf16 %v1542, %v1540
        %v1592 = vpack.c.bf16 %v1545, %v1543
        %v1593 = vpack.c.bf16 %v1546, %v1544
        %v1594 = vpack.c.bf16 %v1549, %v1547
        %v1595 = vpack.c.bf16 %v1550, %v1548
        %v1596 = vpack.c.bf16 %v1553, %v1551
        %v1597 = vpack.c.bf16 %v1554, %v1552
        %v1598 = vpack.c.bf16 %v1557, %v1555
        %v1599 = vpack.c.bf16 %v1558, %v1556
        %v1600 = vpack.c.bf16 %v1561, %v1559
        %v1601 = vpack.c.bf16 %v1562, %v1560
        %v1602 = vpack.c.bf16 %v1565, %v1563
        %v1603 = vpack.c.bf16 %v1566, %v1564
        %v1604 = vpack.c.bf16 %v1569, %v1567
        %v1605 = vpack.c.bf16 %v1570, %v1568
        %v1606 = vpack.c.bf16 %v1573, %v1571
        %v1607 = vpack.c.bf16 %v1574, %v1572
        %v1608 = vld [vmem:[%s10] sm:$0x3]
        %1610 = vset.pattern.permute.xlu0 0
        %1611 = vperm.xlu0 %1610, %v1608
        %v1612 = vpop.permute.xlu0 %1611
        %v1616 = vunpack.c.l.s4 1966171168
        %v1617 = vunpack.c.0.s8 %v1616
        %v1618 = vlaneseq
        %v1619 = vshrl.u32 %v1618, 7
        %v1620 = vsub.s32 %v1617, %v1619
        %v1621 = vrot.slane %v1575, %v1620
        %v1622 = vcombine.high %v1621, %v1621
        %v1624 = vunpack.c.l.s4 1966171168
        %v1625 = vunpack.c.0.s8 %v1624
        %v1626 = vlaneseq
        %v1627 = vshrl.u32 %v1626, 7
        %v1628 = vsub.s32 %v1625, %v1627
        %v1629 = vrot.slane %v1621, %v1628
        %v1631 = vunpack.c.l.s4 1966171168
        %v1632 = vunpack.c.0.s8 %v1631
        %v1633 = vlaneseq
        %v1634 = vshrl.u32 %v1633, 7
        %v1635 = vsub.s32 %v1632, %v1634
        %v1636 = vrot.slane %v1622, %v1635
        %1639 = vmatprep.subr.bf16.mxu0 %v1577
        %1640 = vmatpush1.bf16.msra.mxu0 %v1576
        %1641 = vmatprep.subr.bf16.mxu0 %v1579
        %1642 = vmatpush1.bf16.msra.mxu0 %v1578
        %1643 = vmatprep.subr.bf16.mxu0 %v1581
        %1644 = vmatpush1.bf16.msra.mxu0 %v1580
        %1645 = vmatprep.subr.bf16.mxu0 %v1583
        %1646 = vmatpush1.bf16.msra.mxu0 %v1582
        %1647 = vmatprep.subr.bf16.mxu0 %v1585
        %1648 = vmatpush1.bf16.msra.mxu0 %v1584
        %1649 = vmatprep.subr.bf16.mxu0 %v1587
        %1650 = vmatpush1.bf16.msra.mxu0 %v1586
        %1651 = vmatprep.subr.bf16.mxu0 %v1589
        %1652 = vmatpush1.bf16.msra.mxu0 %v1588
        %1653 = vmatprep.subr.bf16.mxu0 %v1591
        %1654 = vmatpush1.bf16.msra.mxu0 %v1590
        %1655 = vmatprep.subr.bf16.mxu0 %v1593
        %1656 = vmatpush1.bf16.msra.mxu0 %v1592
        %1657 = vmatprep.subr.bf16.mxu0 %v1595
        %1658 = vmatpush1.bf16.msra.mxu0 %v1594
        %1659 = vmatprep.subr.bf16.mxu0 %v1597
        %1660 = vmatpush1.bf16.msra.mxu0 %v1596
        %1661 = vmatprep.subr.bf16.mxu0 %v1599
        %1662 = vmatpush1.bf16.msra.mxu0 %v1598
        %1663 = vmatprep.subr.bf16.mxu0 %v1601
        %1664 = vmatpush1.bf16.msra.mxu0 %v1600
        %1665 = vmatprep.subr.bf16.mxu0 %v1603
        %1666 = vmatpush1.bf16.msra.mxu0 %v1602
        %1667 = vmatprep.subr.bf16.mxu0 %v1605
        %1668 = vmatpush1.bf16.msra.mxu0 %v1604
        %1669 = vmatprep.subr.bf16.mxu0 %v1607
        %1670 = vmatpush1.bf16.msra.mxu0 %v1606
        %1671 = vmatprep.mubr.bf16.mxu0 %v1636
        %1672 = vmatmul.mubr.bf16.gmra.mrb[0].mxu0 %v1629
        %v1673 = vpop.f32.mrb[0].mxu0
        %v1674 = vadd.f32 %v1612, %v1673
        %v1675 = vpop.f32.mrb[0].mxu0
        %v1676 = vadd.f32 %v1612, %v1675
        %v1677 = vpop.f32.mrb[0].mxu0
        %v1678 = vpop.f32.mrb[0].mxu0
        %1679 = vdwg.mxu0
        %vm1680 = vcmask 1041408
        %v1681 = vsel %vm1680, %v1674, -inf
        %v1682 = vrot.slane %v1681, 4
        %v1683 = vmax.f32 %v1681, %v1682
        %v1684 = vrot.slane %v1683, 2
        %v1685 = vmax.f32 %v1683, %v1684
        %v1686 = vrot.slane %v1685, 1
        %v1687 = vmax.f32 %v1685, %v1686
        %v1688 = vsel %vm1680, %v1676, -inf
        %v1689 = vrot.slane %v1688, 4
        %v1690 = vmax.f32 %v1688, %v1689
        %v1691 = vrot.slane %v1690, 2
        %v1692 = vmax.f32 %v1690, %v1691
        %v1693 = vrot.slane %v1692, 1
        %v1694 = vmax.f32 %v1692, %v1693
        %v1695 = vsub.f32 %v1674, %v1687
        %v1696 = vsub.f32 %v1676, %v1694
        %v1697 = vmul.f32 %v1695, 1.442695
        %v1698 = vpow.pop %v1697
        %v1699 = vmul.f32 %v1696, 1.442695
        %v1700 = vpow.pop %v1699
        %v1701 = vsel %vm1680, %v1698, 0.0
        %v1702 = vrot.slane %v1701, 4
        %v1703 = vadd.f32 %v1701, %v1702
        %v1704 = vrot.slane %v1703, 2
        %v1705 = vadd.f32 %v1703, %v1704
        %v1706 = vrot.slane %v1705, 1
        %v1707 = vadd.f32 %v1705, %v1706
        %v1708 = vsel %vm1680, %v1700, 0.0
        %v1709 = vrot.slane %v1708, 4
        %v1710 = vadd.f32 %v1708, %v1709
        %v1711 = vrot.slane %v1710, 2
        %v1712 = vadd.f32 %v1710, %v1711
        %v1713 = vrot.slane %v1712, 1
        %v1714 = vadd.f32 %v1712, %v1713
        %v1715 = vlog2.pop %v1707
        %v1716 = vmul.f32 %v1715, 0.6931472
        %v1717 = vlog2.pop %v1714
        %v1718 = vmul.f32 %v1717, 0.6931472
        %v1719 = vsub.f32 %v1695, %v1716
        %v1720 = vsub.f32 %v1696, %v1718
        %v1721 = vpack.c.bf16 %v1719, %v1719
        %v1722 = vpack.c.bf16 %v1720, %v1720
        %v1725 = vcombine.low %v1721, %v1722
        %v1727 = vunpack.c.l.s4 1966171168
        %v1728 = vunpack.c.0.s8 %v1727
        %v1729 = vlaneseq
        %v1730 = vshrl.u32 %v1729, 7
        %v1731 = vsub.s32 %v1728, %v1730
        %v1732 = vrot.slane %v1725, %v1731
        %v1734 = vunpack.c.l.s4 1966171168
        %v1735 = vunpack.c.0.s8 %v1734
        %v1736 = vlaneseq
        %v1737 = vshrl.u32 %v1736, 7
        %v1738 = vsub.s32 %v1735, %v1737
        %v1739 = vrot.slane %v1732, %v1738
        %1741 = vst [vmem:[%s378] sm:$0x3] %v1739
        %s1742 = sand.u32 %s269, 1
        %s1743 = scalar_lea.sflag [#allocation3], %s1742
        %s1744 = sand.u32 %s269, 1
        %s1745 = smul.addr %s1744, 2
        %s1746 = scalar_lea.vmem [#allocation2], %s1745
        // Predicated region
        $region65: #{tpu_custom_call.1} parent=63 // pred_check
          %p1747 = pneg %p279
        $region66: #{tpu_custom_call.1} parent=63 // pred_check_branch
          %1749 = sbr.rel (%p1747) target = $region68
        $region67: #{tpu_custom_call.1} parent=63 // pred_region
          %s1750 = smul.u32 2, %s25
          %s1752 = ssub.s32 32, 32
          %1753 = vsyncadd %s1743, %s1752
          %s1754 = smul.addr %s1750, 16
          %s1755 = scalar_lea.hbm %s11, %s1754
          %s1757 = sshll.u32 %s1746, 4
          %s1758 = int_to_ptr.vmem [resolvable:$true] %s1757
          %1760 = dma.vmem_to_hbm [thread:$0]  %s1758, 32, %s1755, %s1743
        $region68: #{tpu_custom_call.1} parent=63 // pred_fallthru
          _
      $region64: #{tpu_custom_call.1} parent=5 // pred_fallthru
        _
      %p1761 = scmp.le.s32.totalorder 2, %s20
      // Predicated region
      $region69: #{tpu_custom_call.1} parent=5 // pred_check
        %p1762 = pneg %p1761
      $region70: #{tpu_custom_call.1} parent=5 // pred_check_branch
        %1764 = sbr.rel (%p1762) target = $region72
      $region71: #{tpu_custom_call.1} parent=5 // pred_region
        %s1765 = ssub.s32 %s20, 2
        // Predicated region
        $region73: #{tpu_custom_call.1} parent=71 // pred_check
          %p1766 = pneg %p285
        $region74: #{tpu_custom_call.1} parent=71 // pred_check_branch
          %1768 = sbr.rel (%p1766) target = $region76
        $region75: #{tpu_custom_call.1} parent=71 // pred_region
          %s1769 = sand.u32 %s270, 1
          %s1770 = scalar_lea.sflag [#allocation3], %s1769
          %s1771 = sand.u32 %s270, 1
          %s1772 = smul.addr %s1771, 2
          %s1773 = scalar_lea.vmem [#allocation2], %s1772
          %1774 = dma.done %s1770, 32
        $region76: #{tpu_custom_call.1} parent=71 // pred_fallthru
          _
      $region72: #{tpu_custom_call.1} parent=5 // pred_fallthru
        _
    $region6: #{tpu_custom_call.1} parent=1 // loop_footer
      %s24 = sadd.s32 1, %s20
    $region7: #{tpu_custom_call.1} parent=1 // loop_footer_branch
      %19 = sbr.rel target = $region3
    $region8: #{tpu_custom_call.1} parent=1 // loop_exit
      _
    %1775 = vsyncpa [#allocation3], 1
    %s1776 = scalar_lea.sflag [#allocation3], 1
    %1777 = vsyncpa %s1776, 1

</llo_original>
